<compile_context>
chip_gen: v6e
topology: v6e:2x2x1
jax: 0.10.0
libtpu: 0.0.40
codegen_flags: <defaults>
</compile_context>

<pallas_src>
import functools

import jax
import jax.numpy as jnp
from jax import lax
from jax.experimental import pallas as pl
from jax.experimental.pallas import tpu as pltpu


def _choose_tile(dim, target, align):
    """Largest tile <= target that divides `dim` and is a multiple of `align`.

    Falls back to the full dimension (always a legal BlockSpec block dim).
    NOTE: for awkward (e.g. prime) dims this means one big block; the per-call
    VMEM budget below will then grow accordingly and the compiler will fail
    loudly rather than silently corrupting.
    """
    if dim <= target:
        return dim
    t = (target // align) * align
    while t >= align:
        if dim % t == 0:
            return t
        t -= align
    return dim


def _vmem_budget(est_bytes):
    """Per-kernel VMEM limit: estimated footprint + headroom, clamped so it
    stays at/above the 32 MiB v6e/v7x scoped default and below v7x's 64 MiB
    physical per-TC ceiling."""
    return int(min(max(est_bytes + (8 << 20), 32 << 20), 60 << 20))


# ----------------------------------------------------------------------------
# Tiled linear kernel: y = x @ w_t + b   (bf16 MXU operands, fp32 accumulation)
# ----------------------------------------------------------------------------
def _linear_kernel(x_ref, w_ref, b_ref, o_ref, acc_ref):
    # x_ref: (tm, tk), w_ref: (tk, tn) [bf16], b_ref: (1, tn), o_ref: (tm, tn)
    @pl.when(pl.program_id(2) == 0)
    def _init():
        acc_ref[...] = jnp.zeros(acc_ref.shape, acc_ref.dtype)

    acc_ref[...] += jnp.dot(
        x_ref[...].astype(jnp.bfloat16),
        w_ref[...].astype(jnp.bfloat16),
        preferred_element_type=jnp.float32)

    @pl.when(pl.program_id(2) == pl.num_programs(2) - 1)
    def _finalize():
        o_ref[...] = (acc_ref[...] + b_ref[...].astype(jnp.float32)).astype(
            o_ref.dtype)


def linear(x, w_t, b, *, tm=1024, tn=512, tk=512):
    """y = x @ w_t + b with K-axis accumulation and M/N megacore parallelism."""
    m, k = x.shape
    _, n = w_t.shape
    tm = _choose_tile(m, tm, 8)
    tn = _choose_tile(n, tn, 128)
    tk = _choose_tile(k, tk, 128)
    b2 = b.reshape(1, n)
    grid = (m // tm, n // tn, k // tk)

    blk_bytes = (tm * tk * x.dtype.itemsize          # x block
                 + tk * tn * w_t.dtype.itemsize      # w block
                 + tn * b2.dtype.itemsize            # bias block
                 + tm * tn * x.dtype.itemsize)       # out block
    scratch_bytes = tm * tn * 4                      # fp32 accumulator

    return pl.pallas_call(
        _linear_kernel,
        out_shape=jax.ShapeDtypeStruct((m, n), x.dtype),
        grid=grid,
        in_specs=[
            pl.BlockSpec((tm, tk), lambda i, j, kk: (i, kk)),
            pl.BlockSpec((tk, tn), lambda i, j, kk: (kk, j)),
            pl.BlockSpec((1, tn), lambda i, j, kk: (0, j)),
        ],
        out_specs=pl.BlockSpec((tm, tn), lambda i, j, kk: (i, j)),
        scratch_shapes=[pltpu.VMEM((tm, tn), jnp.float32)],
        compiler_params=pltpu.CompilerParams(
            dimension_semantics=("parallel", "parallel", "arbitrary"),
            vmem_limit_bytes=_vmem_budget(2 * blk_bytes + scratch_bytes)),
    )(x, w_t, b2)


# ----------------------------------------------------------------------------
# Flash-style attention kernel (online softmax over the KV grid axis).
# Q/K/V come straight from the (B, N, 3, H, Dh) view of the qkv linear output
# (no wrapper transposes).  Output is written in one lane-dense (tq, E) store,
# already in 'b n (h d)' layout.
# ----------------------------------------------------------------------------
def _mha_flash_kernel(q_ref, k_ref, v_ref, o_ref, m_ref, l_ref, acc_ref, *,
                      num_heads, inv_scale, exp_dtype):
    # q_ref: (tq, H, Dh); k_ref/v_ref: (tkv, H, Dh); o_ref: (tq, H*Dh)
    # m_ref/l_ref: (H, tq, 1) f32; acc_ref: (H, tq, Dh) f32
    kv = pl.program_id(2)

    @pl.when(kv == 0)
    def _init():
        m_ref[...] = jnp.full(m_ref.shape, -jnp.inf, dtype=m_ref.dtype)
        l_ref[...] = jnp.zeros(l_ref.shape, l_ref.dtype)
        acc_ref[...] = jnp.zeros(acc_ref.shape, acc_ref.dtype)

    for h in range(num_heads):  # static unroll; per-head 2-D MXU matmuls
        qh = q_ref[:, h, :].astype(jnp.bfloat16)           # (tq, Dh)
        kh = k_ref[:, h, :].astype(jnp.bfloat16)           # (tkv, Dh)
        # energy[q, k] = sum_d qh[q, d] * kh[k, d]   (no transposed copy of k)
        s = lax.dot_general(
            qh, kh,
            dimension_numbers=(((1,), (1,)), ((), ())),
            preferred_element_type=jnp.float32)             # (tq, tkv) f32

        m_prev = m_ref[h]                                   # (tq, 1)
        m_new = jnp.maximum(m_prev, jnp.max(s, axis=-1, keepdims=True))
        alpha = jnp.exp(m_prev - m_new)                     # (tq, 1) f32
        # exp_dtype=bf16 on v6e/v7x roughly doubles EUP throughput; keep f32 on v5e.
        p = jnp.exp((s - m_new).astype(exp_dtype))          # (tq, tkv)
        l_ref[h] = alpha * l_ref[h] + jnp.sum(
            p.astype(jnp.float32), axis=-1, keepdims=True)
        pv = lax.dot_general(
            p.astype(jnp.bfloat16), v_ref[:, h, :].astype(jnp.bfloat16),
            dimension_numbers=(((1,), (0,)), ((), ())),
            preferred_element_type=jnp.float32)             # (tq, Dh) f32
        acc_ref[h] = alpha * acc_ref[h] + pv
        m_ref[h] = m_new

    @pl.when(kv == pl.num_programs(2) - 1)
    def _finalize():
        outs = []
        for h in range(num_heads):
            # softmax normalization and the post-softmax 1/sqrt(E) scale fused
            # into a single EUP approx reciprocal + one multiply.
            inv_l = pl.reciprocal(l_ref[h], approx=True) * inv_scale  # (tq, 1)
            outs.append((acc_ref[h] * inv_l).astype(o_ref.dtype))
        # Single lane-dense store of the whole (tq, H*Dh) slab.
        o_ref[...] = jnp.concatenate(outs, axis=-1)


def flash_attention(qkv5, emb_size, num_heads, *, tq=512, tkv=512,
                    exp_dtype=jnp.float32):
    """qkv5: (B, N, 3, H, Dh) with selector order [q|k|v] -> out: (B, N, H*Dh)."""
    B, N, three, H, Dh = qkv5.shape
    assert three == 3 and H == num_heads
    E = H * Dh
    tq = _choose_tile(N, tq, 8)
    tkv = _choose_tile(N, tkv, 128)   # 128-aligned: lane dim of energy, K of p@v
    inv_scale = 1.0 / (float(emb_size) ** 0.5)
    kern = functools.partial(_mha_flash_kernel, num_heads=H,
                             inv_scale=inv_scale, exp_dtype=exp_dtype)

    isz = qkv5.dtype.itemsize
    blk_bytes = (tq * E + 2 * tkv * E) * isz + tq * E * isz
    scratch_bytes = (H * tq * Dh + 2 * H * tq) * 4

    return pl.pallas_call(
        kern,
        out_shape=jax.ShapeDtypeStruct((B, N, E), qkv5.dtype),
        grid=(B, N // tq, N // tkv),
        in_specs=[
            # Same array three times; index_map pins the qkv selector dim.
            pl.BlockSpec((None, tq, None, H, Dh),
                         lambda b, qi, kv: (b, qi, 0, 0, 0)),   # queries
            pl.BlockSpec((None, tkv, None, H, Dh),
                         lambda b, qi, kv: (b, kv, 1, 0, 0)),   # keys
            pl.BlockSpec((None, tkv, None, H, Dh),
                         lambda b, qi, kv: (b, kv, 2, 0, 0)),   # values
        ],
        out_specs=pl.BlockSpec((None, tq, E), lambda b, qi, kv: (b, qi, 0)),
        scratch_shapes=[
            pltpu.VMEM((H, tq, 1), jnp.float32),    # running max
            pltpu.VMEM((H, tq, 1), jnp.float32),    # running sum
            pltpu.VMEM((H, tq, Dh), jnp.float32),   # output accumulator
        ],
        compiler_params=pltpu.CompilerParams(
            dimension_semantics=("parallel", "parallel", "arbitrary"),
            vmem_limit_bytes=_vmem_budget(2 * blk_bytes + scratch_bytes)),
    )(qkv5, qkv5, qkv5)


# ----------------------------------------------------------------------------
# Parameters
# ----------------------------------------------------------------------------
def init_params(key, emb_size):
    """PyTorch-layout parameters: weight is (out_features, in_features)."""
    k1, k2, k3, k4 = jax.random.split(key, 4)
    scale = 0.02
    w_qkv = jax.random.normal(k1, (3 * emb_size, emb_size), jnp.float32) * scale
    b_qkv = jax.random.normal(k2, (3 * emb_size,), jnp.float32) * scale
    w_proj = jax.random.normal(k3, (emb_size, emb_size), jnp.float32) * scale
    b_proj = jax.random.normal(k4, (emb_size,), jnp.float32) * scale
    return dict(w_qkv=w_qkv, b_qkv=b_qkv, w_proj=w_proj, b_proj=b_proj)


def prepare_params(params, emb_size, num_heads):
    """One-time prep: transpose weights, cast them to bf16 (MXU operands), and
    permute the qkv output columns so the linear's output is contiguous
    [q | k | v], each chunk (h, d)-major.

    PyTorch column c <-> (h, d, s) with s (the qkv selector) fastest:
      c = h*Dh*3 + d*3 + s.  New column (s, h, d) pulls old column idx[s,h,d].
    """
    E, H = emb_size, num_heads
    Dh = E // H
    idx = (jnp.arange(H)[None, :, None] * (Dh * 3)
           + jnp.arange(Dh)[None, None, :] * 3
           + jnp.arange(3)[:, None, None]).reshape(3 * E)
    return dict(
        w_qkv_t=params["w_qkv"].T[:, idx].astype(jnp.bfloat16),  # (E, 3E)
        b_qkv=params["b_qkv"][idx],                              # (3E,) f32
        w_proj_t=params["w_proj"].T.astype(jnp.bfloat16),        # (E, E)
        b_proj=params["b_proj"],                                 # (E,)  f32
    )


# ----------------------------------------------------------------------------
# Module forward
# ----------------------------------------------------------------------------
def multi_head_attention(prepared, x, num_heads, mask=None):
    # The reference module's mask branch is a no-op (non-inplace mask_fill with
    # discarded result); fail loudly rather than pretend masking works.
    if mask is not None:
        raise NotImplementedError(
            "mask is a no-op in the reference MultiHeadAttention and is not "
            "supported here; pass mask=None")
    B, N, E = x.shape
    H = num_heads
    assert E % H == 0
    Dh = E // H

    # qkv linear (tiled Pallas kernel); output columns are [q | k | v].
    qkv = linear(x.reshape(B * N, E), prepared["w_qkv_t"], prepared["b_qkv"])

    # Free metadata reshape: (B*N, 3E) -> (B, N, 3, H, Dh). No HBM transpose;
    # the attention BlockSpecs slice q/k/v out of this view directly.
    qkv5 = qkv.reshape(B, N, 3, H, Dh)

    # Flash attention (Pallas kernel) -> (B, N, H*Dh) = 'b n (h d)'.
    # TODO(synk): on v6e/v7x pass exp_dtype=jnp.bfloat16 to unblock the EUP.
    out = flash_attention(qkv5, E, H)

    # Output projection (tiled Pallas kernel).
    out = linear(out.reshape(B * N, E), prepared["w_proj_t"], prepared["b_proj"])
    return out.reshape(B, N, E)


# Pure-JAX reference (PyTorch semantics, fp32 unpermuted params) for verification.
def reference(params, x, num_heads):
    B, N, E = x.shape
    H = num_heads
    Dh = E // H
    qkv = x @ params["w_qkv"].T + params["b_qkv"]
    qkv = qkv.reshape(B, N, H, Dh, 3)
    q = jnp.transpose(qkv[..., 0], (0, 2, 1, 3))
    k = jnp.transpose(qkv[..., 1], (0, 2, 1, 3))
    v = jnp.transpose(qkv[..., 2], (0, 2, 1, 3))
    energy = jnp.einsum("bhqd,bhkd->bhqk", q, k)
    att = jax.nn.softmax(energy, axis=-1) / (E ** 0.5)
    out = jnp.einsum("bhal,bhlv->bhav", att, v)
    out = jnp.transpose(out, (0, 2, 1, 3)).reshape(B, N, E)
    return out @ params["w_proj"].T + params["b_proj"]


if __name__ == "__main__":
    B, N, E, H = 2, 8, 32, 4
    key = jax.random.PRNGKey(0)
    kx, kp = jax.random.split(key)
    x = jax.random.normal(kx, (B, N, E), jnp.float32)
    params = init_params(kp, E)
    prepared = prepare_params(params, E, H)

    fwd = jax.jit(functools.partial(multi_head_attention, num_heads=H))
    out = jax.block_until_ready(fwd(prepared, x))

    ref = jax.block_until_ready(reference(params, x, H))
    assert out.shape == (B, N, E)
    # tolerance 2e-3: bf16 MXU operands (weights + in-kernel activation casts)
    # plus the EUP approx reciprocal in the softmax normalization; all
    # accumulators and softmax stats stay fp32.
    assert jnp.allclose(out, ref, atol=2e-3, rtol=2e-3), "mismatch vs reference"
    print("KERNEL_OK")
</pallas_src>

<mosaic_0001>
module attributes {stable_mosaic.version = 11 : i64} {
  func.func @_linear_kernel(%arg0: i32, %arg1: i32, %arg2: i32, %arg3: memref<16x32xf32, #tpu.memory_space<vmem>>, %arg4: memref<32x32xbf16, #tpu.memory_space<vmem>>, %arg5: memref<1x32xf32, #tpu.memory_space<vmem>>, %arg6: memref<16x32xf32, #tpu.memory_space<vmem>>, %arg7: memref<16x32xf32, #tpu.memory_space<vmem>>) attributes {dimension_semantics = [#tpu.dimension_semantics<parallel>, #tpu.dimension_semantics<parallel>, #tpu.dimension_semantics<arbitrary>], iteration_bounds = array<i64: 1, 1, 1>, scalar_prefetch = 0 : i64, scratch_operands = 1 : i64, tpu.core_type = #tpu.core_type<tc>, window_params = [{transform_indices = @transform_0, window_bounds = array<i64: 16, 32>}, {transform_indices = @transform_1, window_bounds = array<i64: 32, 32>}, {transform_indices = @transform_2, window_bounds = array<i64: 1, 32>}, {transform_indices = @transform_3, window_bounds = array<i64: 16, 32>}]} {
    %c0_i32 = arith.constant 0 : i32
    %0 = arith.cmpi eq, %arg2, %c0_i32 : i32
    %1 = arith.extui %0 : i1 to i32
    %c0_i32_0 = arith.constant 0 : i32
    %2 = arith.cmpi ne, %1, %c0_i32_0 : i32
    scf.if %2 {
      %cst_10 = arith.constant 0.000000e+00 : f32
      %13 = vector.broadcast %cst_10 : f32 to vector<16x32xf32>
      %c0_11 = arith.constant 0 : index
      %c0_12 = arith.constant 0 : index
      %14 = vector.load %arg7[%c0_11, %c0_12] : memref<16x32xf32, #tpu.memory_space<vmem>>, vector<16x32xf32>
      tpu.vector_store %arg7[%c0_11, %c0_12], %13 {strides = array<i32>} : memref<16x32xf32, #tpu.memory_space<vmem>>, vector<16x32xf32>,
    } else {
    }
    %c0 = arith.constant 0 : index
    %c0_1 = arith.constant 0 : index
    %3 = vector.load %arg7[%c0, %c0_1] : memref<16x32xf32, #tpu.memory_space<vmem>>, vector<16x32xf32>
    %c0_2 = arith.constant 0 : index
    %c0_3 = arith.constant 0 : index
    %4 = vector.load %arg3[%c0_2, %c0_3] : memref<16x32xf32, #tpu.memory_space<vmem>>, vector<16x32xf32>
    %5 = arith.truncf %4 : vector<16x32xf32> to vector<16x32xbf16>
    %c0_4 = arith.constant 0 : index
    %c0_5 = arith.constant 0 : index
    %6 = vector.load %arg4[%c0_4, %c0_5] : memref<32x32xbf16, #tpu.memory_space<vmem>>, vector<32x32xbf16>
    %cst = arith.constant dense<0.000000e+00> : vector<16x32xf32>
    %7 = tpu.matmul %5, %6, %cst {dimension_numbers = #tpu.dot_dimension_numbers<[1], [0], [0], [1], [0, 0, 1, 1], [], []>} : vector<16x32xbf16>, vector<32x32xbf16>, vector<16x32xf32> -> vector<16x32xf32>
    %8 = arith.addf %3, %7 : vector<16x32xf32>
    %c0_6 = arith.constant 0 : index
    %c0_7 = arith.constant 0 : index
    %9 = vector.load %arg7[%c0_6, %c0_7] : memref<16x32xf32, #tpu.memory_space<vmem>>, vector<16x32xf32>
    tpu.vector_store %arg7[%c0_6, %c0_7], %8 {strides = array<i32>} : memref<16x32xf32, #tpu.memory_space<vmem>>, vector<16x32xf32>,
    %c0_i32_8 = arith.constant 0 : i32
    %10 = arith.cmpi eq, %arg2, %c0_i32_8 : i32
    %11 = arith.extui %10 : i1 to i32
    %c0_i32_9 = arith.constant 0 : i32
    %12 = arith.cmpi ne, %11, %c0_i32_9 : i32
    scf.if %12 {
      %c0_10 = arith.constant 0 : index
      %c0_11 = arith.constant 0 : index
      %13 = vector.load %arg7[%c0_10, %c0_11] : memref<16x32xf32, #tpu.memory_space<vmem>>, vector<16x32xf32>
      %c0_12 = arith.constant 0 : index
      %c0_13 = arith.constant 0 : index
      %14 = vector.load %arg5[%c0_12, %c0_13] : memref<1x32xf32, #tpu.memory_space<vmem>>, vector<1x32xf32>
      %15 = vector.broadcast %14 : vector<1x32xf32> to vector<16x32xf32>
      %16 = arith.addf %13, %15 : vector<16x32xf32>
      %c0_14 = arith.constant 0 : index
      %c0_15 = arith.constant 0 : index
      %17 = vector.load %arg6[%c0_14, %c0_15] : memref<16x32xf32, #tpu.memory_space<vmem>>, vector<16x32xf32>
      tpu.vector_store %arg6[%c0_14, %c0_15], %16 {strides = array<i32>} : memref<16x32xf32, #tpu.memory_space<vmem>>, vector<16x32xf32>,
    } else {
    }
    return
  }
  func.func @transform_0(%arg0: i32, %arg1: i32, %arg2: i32) -> (i32, i32) {
    %c0_i32 = arith.constant 0 : i32
    return %arg0, %arg2 : i32, i32
  }
  func.func @transform_1(%arg0: i32, %arg1: i32, %arg2: i32) -> (i32, i32) {
    %c0_i32 = arith.constant 0 : i32
    return %arg2, %arg1 : i32, i32
  }
  func.func @transform_2(%arg0: i32, %arg1: i32, %arg2: i32) -> (i32, i32) {
    %c0_i32 = arith.constant 0 : i32
    %c0_i32_0 = arith.constant 0 : i32
    return %c0_i32, %arg1 : i32, i32
  }
  func.func @transform_3(%arg0: i32, %arg1: i32, %arg2: i32) -> (i32, i32) {
    %c0_i32 = arith.constant 0 : i32
    return %arg0, %arg1 : i32, i32
  }
}

module attributes {stable_mosaic.version = 11 : i64} {
  func.func @_linear_kernel(%arg0: i32, %arg1: i32, %arg2: i32, %arg3: memref<16x32xf32, #tpu.memory_space<vmem>>, %arg4: memref<32x96xbf16, #tpu.memory_space<vmem>>, %arg5: memref<1x96xf32, #tpu.memory_space<vmem>>, %arg6: memref<16x96xf32, #tpu.memory_space<vmem>>, %arg7: memref<16x96xf32, #tpu.memory_space<vmem>>) attributes {dimension_semantics = [#tpu.dimension_semantics<parallel>, #tpu.dimension_semantics<parallel>, #tpu.dimension_semantics<arbitrary>], iteration_bounds = array<i64: 1, 1, 1>, scalar_prefetch = 0 : i64, scratch_operands = 1 : i64, tpu.core_type = #tpu.core_type<tc>, window_params = [{transform_indices = @transform_0, window_bounds = array<i64: 16, 32>}, {transform_indices = @transform_1, window_bounds = array<i64: 32, 96>}, {transform_indices = @transform_2, window_bounds = array<i64: 1, 96>}, {transform_indices = @transform_3, window_bounds = array<i64: 16, 96>}]} {
    %c0_i32 = arith.constant 0 : i32
    %0 = arith.cmpi eq, %arg2, %c0_i32 : i32
    %1 = arith.extui %0 : i1 to i32
    %c0_i32_0 = arith.constant 0 : i32
    %2 = arith.cmpi ne, %1, %c0_i32_0 : i32
    scf.if %2 {
      %cst_10 = arith.constant 0.000000e+00 : f32
      %13 = vector.broadcast %cst_10 : f32 to vector<16x96xf32>
      %c0_11 = arith.constant 0 : index
      %c0_12 = arith.constant 0 : index
      %14 = vector.load %arg7[%c0_11, %c0_12] : memref<16x96xf32, #tpu.memory_space<vmem>>, vector<16x96xf32>
      tpu.vector_store %arg7[%c0_11, %c0_12], %13 {strides = array<i32>} : memref<16x96xf32, #tpu.memory_space<vmem>>, vector<16x96xf32>,
    } else {
    }
    %c0 = arith.constant 0 : index
    %c0_1 = arith.constant 0 : index
    %3 = vector.load %arg7[%c0, %c0_1] : memref<16x96xf32, #tpu.memory_space<vmem>>, vector<16x96xf32>
    %c0_2 = arith.constant 0 : index
    %c0_3 = arith.constant 0 : index
    %4 = vector.load %arg3[%c0_2, %c0_3] : memref<16x32xf32, #tpu.memory_space<vmem>>, vector<16x32xf32>
    %5 = arith.truncf %4 : vector<16x32xf32> to vector<16x32xbf16>
    %c0_4 = arith.constant 0 : index
    %c0_5 = arith.constant 0 : index
    %6 = vector.load %arg4[%c0_4, %c0_5] : memref<32x96xbf16, #tpu.memory_space<vmem>>, vector<32x96xbf16>
    %cst = arith.constant dense<0.000000e+00> : vector<16x96xf32>
    %7 = tpu.matmul %5, %6, %cst {dimension_numbers = #tpu.dot_dimension_numbers<[1], [0], [0], [1], [0, 0, 1, 1], [], []>} : vector<16x32xbf16>, vector<32x96xbf16>, vector<16x96xf32> -> vector<16x96xf32>
    %8 = arith.addf %3, %7 : vector<16x96xf32>
    %c0_6 = arith.constant 0 : index
    %c0_7 = arith.constant 0 : index
    %9 = vector.load %arg7[%c0_6, %c0_7] : memref<16x96xf32, #tpu.memory_space<vmem>>, vector<16x96xf32>
    tpu.vector_store %arg7[%c0_6, %c0_7], %8 {strides = array<i32>} : memref<16x96xf32, #tpu.memory_space<vmem>>, vector<16x96xf32>,
    %c0_i32_8 = arith.constant 0 : i32
    %10 = arith.cmpi eq, %arg2, %c0_i32_8 : i32
    %11 = arith.extui %10 : i1 to i32
    %c0_i32_9 = arith.constant 0 : i32
    %12 = arith.cmpi ne, %11, %c0_i32_9 : i32
    scf.if %12 {
      %c0_10 = arith.constant 0 : index
      %c0_11 = arith.constant 0 : index
      %13 = vector.load %arg7[%c0_10, %c0_11] : memref<16x96xf32, #tpu.memory_space<vmem>>, vector<16x96xf32>
      %c0_12 = arith.constant 0 : index
      %c0_13 = arith.constant 0 : index
      %14 = vector.load %arg5[%c0_12, %c0_13] : memref<1x96xf32, #tpu.memory_space<vmem>>, vector<1x96xf32>
      %15 = vector.broadcast %14 : vector<1x96xf32> to vector<16x96xf32>
      %16 = arith.addf %13, %15 : vector<16x96xf32>
      %c0_14 = arith.constant 0 : index
      %c0_15 = arith.constant 0 : index
      %17 = vector.load %arg6[%c0_14, %c0_15] : memref<16x96xf32, #tpu.memory_space<vmem>>, vector<16x96xf32>
      tpu.vector_store %arg6[%c0_14, %c0_15], %16 {strides = array<i32>} : memref<16x96xf32, #tpu.memory_space<vmem>>, vector<16x96xf32>,
    } else {
    }
    return
  }
  func.func @transform_0(%arg0: i32, %arg1: i32, %arg2: i32) -> (i32, i32) {
    %c0_i32 = arith.constant 0 : i32
    return %arg0, %arg2 : i32, i32
  }
  func.func @transform_1(%arg0: i32, %arg1: i32, %arg2: i32) -> (i32, i32) {
    %c0_i32 = arith.constant 0 : i32
    return %arg2, %arg1 : i32, i32
  }
  func.func @transform_2(%arg0: i32, %arg1: i32, %arg2: i32) -> (i32, i32) {
    %c0_i32 = arith.constant 0 : i32
    %c0_i32_0 = arith.constant 0 : i32
    return %c0_i32, %arg1 : i32, i32
  }
  func.func @transform_3(%arg0: i32, %arg1: i32, %arg2: i32) -> (i32, i32) {
    %c0_i32 = arith.constant 0 : i32
    return %arg0, %arg1 : i32, i32
  }
}

module attributes {stable_mosaic.version = 11 : i64} {
  func.func @_mha_flash_kernel(%arg0: i32, %arg1: i32, %arg2: i32, %arg3: memref<1x8x1x4x8xf32, #tpu.memory_space<vmem>>, %arg4: memref<1x8x1x4x8xf32, #tpu.memory_space<vmem>>, %arg5: memref<1x8x1x4x8xf32, #tpu.memory_space<vmem>>, %arg6: memref<1x8x32xf32, #tpu.memory_space<vmem>>, %arg7: memref<4x8x1xf32, #tpu.memory_space<vmem>>, %arg8: memref<4x8x1xf32, #tpu.memory_space<vmem>>, %arg9: memref<4x8x8xf32, #tpu.memory_space<vmem>>) attributes {dimension_semantics = [#tpu.dimension_semantics<parallel>, #tpu.dimension_semantics<parallel>, #tpu.dimension_semantics<arbitrary>], iteration_bounds = array<i64: 2, 1, 1>, scalar_prefetch = 0 : i64, scratch_operands = 3 : i64, tpu.core_type = #tpu.core_type<tc>, window_params = [{transform_indices = @transform_0, window_bounds = array<i64: 1, 8, 1, 4, 8>}, {transform_indices = @transform_1, window_bounds = array<i64: 1, 8, 1, 4, 8>}, {transform_indices = @transform_2, window_bounds = array<i64: 1, 8, 1, 4, 8>}, {transform_indices = @transform_3, window_bounds = array<i64: 1, 8, 32>}]} {
    %c0_i32 = arith.constant 0 : i32
    %0 = arith.cmpi eq, %arg2, %c0_i32 : i32
    %1 = arith.extui %0 : i1 to i32
    %c0_i32_0 = arith.constant 0 : i32
    %2 = arith.cmpi ne, %1, %c0_i32_0 : i32
    scf.if %2 {
      %cst_146 = arith.constant 0xFF800000 : f32
      %174 = vector.broadcast %cst_146 : f32 to vector<4x8x1xf32>
      %c0_147 = arith.constant 0 : index
      %c0_148 = arith.constant 0 : index
      %c0_149 = arith.constant 0 : index
      %175 = vector.load %arg7[%c0_147, %c0_148, %c0_149] : memref<4x8x1xf32, #tpu.memory_space<vmem>>, vector<4x8x1xf32>
      tpu.vector_store %arg7[%c0_147, %c0_148, %c0_149], %174 {strides = array<i32>} : memref<4x8x1xf32, #tpu.memory_space<vmem>>, vector<4x8x1xf32>,
      %cst_150 = arith.constant 0.000000e+00 : f32
      %176 = vector.broadcast %cst_150 : f32 to vector<4x8x1xf32>
      %c0_151 = arith.constant 0 : index
      %c0_152 = arith.constant 0 : index
      %c0_153 = arith.constant 0 : index
      %177 = vector.load %arg8[%c0_151, %c0_152, %c0_153] : memref<4x8x1xf32, #tpu.memory_space<vmem>>, vector<4x8x1xf32>
      tpu.vector_store %arg8[%c0_151, %c0_152, %c0_153], %176 {strides = array<i32>} : memref<4x8x1xf32, #tpu.memory_space<vmem>>, vector<4x8x1xf32>,
      %cst_154 = arith.constant 0.000000e+00 : f32
      %178 = vector.broadcast %cst_154 : f32 to vector<4x8x8xf32>
      %c0_155 = arith.constant 0 : index
      %c0_156 = arith.constant 0 : index
      %c0_157 = arith.constant 0 : index
      %179 = vector.load %arg9[%c0_155, %c0_156, %c0_157] : memref<4x8x8xf32, #tpu.memory_space<vmem>>, vector<4x8x8xf32>
      tpu.vector_store %arg9[%c0_155, %c0_156, %c0_157], %178 {strides = array<i32>} : memref<4x8x8xf32, #tpu.memory_space<vmem>>, vector<4x8x8xf32>,
    } else {
    }
    %c0 = arith.constant 0 : index
    %c0_1 = arith.constant 0 : index
    %c0_2 = arith.constant 0 : index
    %c0_3 = arith.constant 0 : index
    %c0_4 = arith.constant 0 : index
    %3 = vector.load %arg3[%c0, %c0_1, %c0_2, %c0_3, %c0_4] : memref<1x8x1x4x8xf32, #tpu.memory_space<vmem>>, vector<1x8x1x1x8xf32>
    %4 = vector.shape_cast %3 : vector<1x8x1x1x8xf32> to vector<8x8xf32>
    %5 = arith.truncf %4 : vector<8x8xf32> to vector<8x8xbf16>
    %c0_5 = arith.constant 0 : index
    %c0_6 = arith.constant 0 : index
    %c0_7 = arith.constant 0 : index
    %c0_8 = arith.constant 0 : index
    %c0_9 = arith.constant 0 : index
    %6 = vector.load %arg4[%c0_5, %c0_6, %c0_7, %c0_8, %c0_9] : memref<1x8x1x4x8xf32, #tpu.memory_space<vmem>>, vector<1x8x1x1x8xf32>
    %7 = vector.shape_cast %6 : vector<1x8x1x1x8xf32> to vector<8x8xf32>
    %8 = arith.truncf %7 : vector<8x8xf32> to vector<8x8xbf16>
    %cst = arith.constant dense<0.000000e+00> : vector<8x8xf32>
    %9 = tpu.matmul %5, %8, %cst {dimension_numbers = #tpu.dot_dimension_numbers<[1], [1], [0], [0], [0, 0, 1, 0], [], []>} : vector<8x8xbf16>, vector<8x8xbf16>, vector<8x8xf32> -> vector<8x8xf32>
    %c0_10 = arith.constant 0 : index
    %c0_11 = arith.constant 0 : index
    %c0_12 = arith.constant 0 : index
    %10 = vector.load %arg7[%c0_10, %c0_11, %c0_12] : memref<4x8x1xf32, #tpu.memory_space<vmem>>, vector<1x8x1xf32>
    %11 = vector.shape_cast %10 : vector<1x8x1xf32> to vector<8x1xf32>
    %cst_13 = arith.constant dense<0xFF800000> : vector<8xf32>
    %12 = vector.multi_reduction <maximumf>, %9, %cst_13 [1] : vector<8x8xf32> to vector<8xf32>
    %13 = vector.shape_cast %12 : vector<8xf32> to vector<8x1xf32>
    %14 = arith.maximumf %11, %13 : vector<8x1xf32>
    %15 = arith.subf %11, %14 : vector<8x1xf32>
    %16 = math.exp %15 : vector<8x1xf32>
    %17 = vector.broadcast %14 : vector<8x1xf32> to vector<8x8xf32>
    %18 = arith.subf %9, %17 : vector<8x8xf32>
    %19 = math.exp %18 : vector<8x8xf32>
    %c0_14 = arith.constant 0 : index
    %c0_15 = arith.constant 0 : index
    %c0_16 = arith.constant 0 : index
    %20 = vector.load %arg8[%c0_14, %c0_15, %c0_16] : memref<4x8x1xf32, #tpu.memory_space<vmem>>, vector<1x8x1xf32>
    %21 = vector.shape_cast %20 : vector<1x8x1xf32> to vector<8x1xf32>
    %22 = arith.mulf %16, %21 : vector<8x1xf32>
    %cst_17 = arith.constant dense<0.000000e+00> : vector<8xf32>
    %23 = vector.multi_reduction <add>, %19, %cst_17 [1] : vector<8x8xf32> to vector<8xf32>
    %24 = vector.shape_cast %23 : vector<8xf32> to vector<8x1xf32>
    %25 = arith.addf %22, %24 : vector<8x1xf32>
    %c0_18 = arith.constant 0 : index
    %c0_19 = arith.constant 0 : index
    %c0_20 = arith.constant 0 : index
    %26 = vector.load %arg8[%c0_18, %c0_19, %c0_20] : memref<4x8x1xf32, #tpu.memory_space<vmem>>, vector<1x8x1xf32>
    %27 = vector.shape_cast %26 : vector<1x8x1xf32> to vector<8x1xf32>
    %28 = vector.shape_cast %25 : vector<8x1xf32> to vector<1x8x1xf32>
    tpu.vector_store %arg8[%c0_18, %c0_19, %c0_20], %28 {strides = array<i32>} : memref<4x8x1xf32, #tpu.memory_space<vmem>>, vector<1x8x1xf32>,
    %29 = arith.truncf %19 : vector<8x8xf32> to vector<8x8xbf16>
    %c0_21 = arith.constant 0 : index
    %c0_22 = arith.constant 0 : index
    %c0_23 = arith.constant 0 : index
    %c0_24 = arith.constant 0 : index
    %c0_25 = arith.constant 0 : index
    %30 = vector.load %arg5[%c0_21, %c0_22, %c0_23, %c0_24, %c0_25] : memref<1x8x1x4x8xf32, #tpu.memory_space<vmem>>, vector<1x8x1x1x8xf32>
    %31 = vector.shape_cast %30 : vector<1x8x1x1x8xf32> to vector<8x8xf32>
    %32 = arith.truncf %31 : vector<8x8xf32> to vector<8x8xbf16>
    %cst_26 = arith.constant dense<0.000000e+00> : vector<8x8xf32>
    %33 = tpu.matmul %29, %32, %cst_26 {dimension_numbers = #tpu.dot_dimension_numbers<[1], [0], [0], [1], [0, 0, 1, 1], [], []>} : vector<8x8xbf16>, vector<8x8xbf16>, vector<8x8xf32> -> vector<8x8xf32>
    %c0_27 = arith.constant 0 : index
    %c0_28 = arith.constant 0 : index
    %c0_29 = arith.constant 0 : index
    %34 = vector.load %arg9[%c0_27, %c0_28, %c0_29] : memref<4x8x8xf32, #tpu.memory_space<vmem>>, vector<1x8x8xf32>
    %35 = vector.shape_cast %34 : vector<1x8x8xf32> to vector<8x8xf32>
    %36 = vector.broadcast %16 : vector<8x1xf32> to vector<8x8xf32>
    %37 = arith.mulf %36, %35 : vector<8x8xf32>
    %38 = arith.addf %37, %33 : vector<8x8xf32>
    %c0_30 = arith.constant 0 : index
    %c0_31 = arith.constant 0 : index
    %c0_32 = arith.constant 0 : index
    %39 = vector.load %arg9[%c0_30, %c0_31, %c0_32] : memref<4x8x8xf32, #tpu.memory_space<vmem>>, vector<1x8x8xf32>
    %40 = vector.shape_cast %39 : vector<1x8x8xf32> to vector<8x8xf32>
    %41 = vector.shape_cast %38 : vector<8x8xf32> to vector<1x8x8xf32>
    tpu.vector_store %arg9[%c0_30, %c0_31, %c0_32], %41 {strides = array<i32>} : memref<4x8x8xf32, #tpu.memory_space<vmem>>, vector<1x8x8xf32>,
    %c0_33 = arith.constant 0 : index
    %c0_34 = arith.constant 0 : index
    %c0_35 = arith.constant 0 : index
    %42 = vector.load %arg7[%c0_33, %c0_34, %c0_35] : memref<4x8x1xf32, #tpu.memory_space<vmem>>, vector<1x8x1xf32>
    %43 = vector.shape_cast %42 : vector<1x8x1xf32> to vector<8x1xf32>
    %44 = vector.shape_cast %14 : vector<8x1xf32> to vector<1x8x1xf32>
    tpu.vector_store %arg7[%c0_33, %c0_34, %c0_35], %44 {strides = array<i32>} : memref<4x8x1xf32, #tpu.memory_space<vmem>>, vector<1x8x1xf32>,
    %c0_36 = arith.constant 0 : index
    %c0_37 = arith.constant 0 : index
    %c0_38 = arith.constant 0 : index
    %c1 = arith.constant 1 : index
    %c0_39 = arith.constant 0 : index
    %45 = vector.load %arg3[%c0_36, %c0_37, %c0_38, %c1, %c0_39] : memref<1x8x1x4x8xf32, #tpu.memory_space<vmem>>, vector<1x8x1x1x8xf32>
    %46 = vector.shape_cast %45 : vector<1x8x1x1x8xf32> to vector<8x8xf32>
    %47 = arith.truncf %46 : vector<8x8xf32> to vector<8x8xbf16>
    %c0_40 = arith.constant 0 : index
    %c0_41 = arith.constant 0 : index
    %c0_42 = arith.constant 0 : index
    %c1_43 = arith.constant 1 : index
    %c0_44 = arith.constant 0 : index
    %48 = vector.load %arg4[%c0_40, %c0_41, %c0_42, %c1_43, %c0_44] : memref<1x8x1x4x8xf32, #tpu.memory_space<vmem>>, vector<1x8x1x1x8xf32>
    %49 = vector.shape_cast %48 : vector<1x8x1x1x8xf32> to vector<8x8xf32>
    %50 = arith.truncf %49 : vector<8x8xf32> to vector<8x8xbf16>
    %cst_45 = arith.constant dense<0.000000e+00> : vector<8x8xf32>
    %51 = tpu.matmul %47, %50, %cst_45 {dimension_numbers = #tpu.dot_dimension_numbers<[1], [1], [0], [0], [0, 0, 1, 0], [], []>} : vector<8x8xbf16>, vector<8x8xbf16>, vector<8x8xf32> -> vector<8x8xf32>
    %c1_46 = arith.constant 1 : index
    %c0_47 = arith.constant 0 : index
    %c0_48 = arith.constant 0 : index
    %52 = vector.load %arg7[%c1_46, %c0_47, %c0_48] : memref<4x8x1xf32, #tpu.memory_space<vmem>>, vector<1x8x1xf32>
    %53 = vector.shape_cast %52 : vector<1x8x1xf32> to vector<8x1xf32>
    %cst_49 = arith.constant dense<0xFF800000> : vector<8xf32>
    %54 = vector.multi_reduction <maximumf>, %51, %cst_49 [1] : vector<8x8xf32> to vector<8xf32>
    %55 = vector.shape_cast %54 : vector<8xf32> to vector<8x1xf32>
    %56 = arith.maximumf %53, %55 : vector<8x1xf32>
    %57 = arith.subf %53, %56 : vector<8x1xf32>
    %58 = math.exp %57 : vector<8x1xf32>
    %59 = vector.broadcast %56 : vector<8x1xf32> to vector<8x8xf32>
    %60 = arith.subf %51, %59 : vector<8x8xf32>
    %61 = math.exp %60 : vector<8x8xf32>
    %c1_50 = arith.constant 1 : index
    %c0_51 = arith.constant 0 : index
    %c0_52 = arith.constant 0 : index
    %62 = vector.load %arg8[%c1_50, %c0_51, %c0_52] : memref<4x8x1xf32, #tpu.memory_space<vmem>>, vector<1x8x1xf32>
    %63 = vector.shape_cast %62 : vector<1x8x1xf32> to vector<8x1xf32>
    %64 = arith.mulf %58, %63 : vector<8x1xf32>
    %cst_53 = arith.constant dense<0.000000e+00> : vector<8xf32>
    %65 = vector.multi_reduction <add>, %61, %cst_53 [1] : vector<8x8xf32> to vector<8xf32>
    %66 = vector.shape_cast %65 : vector<8xf32> to vector<8x1xf32>
    %67 = arith.addf %64, %66 : vector<8x1xf32>
    %c1_54 = arith.constant 1 : index
    %c0_55 = arith.constant 0 : index
    %c0_56 = arith.constant 0 : index
    %68 = vector.load %arg8[%c1_54, %c0_55, %c0_56] : memref<4x8x1xf32, #tpu.memory_space<vmem>>, vector<1x8x1xf32>
    %69 = vector.shape_cast %68 : vector<1x8x1xf32> to vector<8x1xf32>
    %70 = vector.shape_cast %67 : vector<8x1xf32> to vector<1x8x1xf32>
    tpu.vector_store %arg8[%c1_54, %c0_55, %c0_56], %70 {strides = array<i32>} : memref<4x8x1xf32, #tpu.memory_space<vmem>>, vector<1x8x1xf32>,
    %71 = arith.truncf %61 : vector<8x8xf32> to vector<8x8xbf16>
    %c0_57 = arith.constant 0 : index
    %c0_58 = arith.constant 0 : index
    %c0_59 = arith.constant 0 : index
    %c1_60 = arith.constant 1 : index
    %c0_61 = arith.constant 0 : index
    %72 = vector.load %arg5[%c0_57, %c0_58, %c0_59, %c1_60, %c0_61] : memref<1x8x1x4x8xf32, #tpu.memory_space<vmem>>, vector<1x8x1x1x8xf32>
    %73 = vector.shape_cast %72 : vector<1x8x1x1x8xf32> to vector<8x8xf32>
    %74 = arith.truncf %73 : vector<8x8xf32> to vector<8x8xbf16>
    %cst_62 = arith.constant dense<0.000000e+00> : vector<8x8xf32>
    %75 = tpu.matmul %71, %74, %cst_62 {dimension_numbers = #tpu.dot_dimension_numbers<[1], [0], [0], [1], [0, 0, 1, 1], [], []>} : vector<8x8xbf16>, vector<8x8xbf16>, vector<8x8xf32> -> vector<8x8xf32>
    %c1_63 = arith.constant 1 : index
    %c0_64 = arith.constant 0 : index
    %c0_65 = arith.constant 0 : index
    %76 = vector.load %arg9[%c1_63, %c0_64, %c0_65] : memref<4x8x8xf32, #tpu.memory_space<vmem>>, vector<1x8x8xf32>
    %77 = vector.shape_cast %76 : vector<1x8x8xf32> to vector<8x8xf32>
    %78 = vector.broadcast %58 : vector<8x1xf32> to vector<8x8xf32>
    %79 = arith.mulf %78, %77 : vector<8x8xf32>
    %80 = arith.addf %79, %75 : vector<8x8xf32>
    %c1_66 = arith.constant 1 : index
    %c0_67 = arith.constant 0 : index
    %c0_68 = arith.constant 0 : index
    %81 = vector.load %arg9[%c1_66, %c0_67, %c0_68] : memref<4x8x8xf32, #tpu.memory_space<vmem>>, vector<1x8x8xf32>
    %82 = vector.shape_cast %81 : vector<1x8x8xf32> to vector<8x8xf32>
    %83 = vector.shape_cast %80 : vector<8x8xf32> to vector<1x8x8xf32>
    tpu.vector_store %arg9[%c1_66, %c0_67, %c0_68], %83 {strides = array<i32>} : memref<4x8x8xf32, #tpu.memory_space<vmem>>, vector<1x8x8xf32>,
    %c1_69 = arith.constant 1 : index
    %c0_70 = arith.constant 0 : index
    %c0_71 = arith.constant 0 : index
    %84 = vector.load %arg7[%c1_69, %c0_70, %c0_71] : memref<4x8x1xf32, #tpu.memory_space<vmem>>, vector<1x8x1xf32>
    %85 = vector.shape_cast %84 : vector<1x8x1xf32> to vector<8x1xf32>
    %86 = vector.shape_cast %56 : vector<8x1xf32> to vector<1x8x1xf32>
    tpu.vector_store %arg7[%c1_69, %c0_70, %c0_71], %86 {strides = array<i32>} : memref<4x8x1xf32, #tpu.memory_space<vmem>>, vector<1x8x1xf32>,
    %c0_72 = arith.constant 0 : index
    %c0_73 = arith.constant 0 : index
    %c0_74 = arith.constant 0 : index
    %c2 = arith.constant 2 : index
    %c0_75 = arith.constant 0 : index
    %87 = vector.load %arg3[%c0_72, %c0_73, %c0_74, %c2, %c0_75] : memref<1x8x1x4x8xf32, #tpu.memory_space<vmem>>, vector<1x8x1x1x8xf32>
    %88 = vector.shape_cast %87 : vector<1x8x1x1x8xf32> to vector<8x8xf32>
    %89 = arith.truncf %88 : vector<8x8xf32> to vector<8x8xbf16>
    %c0_76 = arith.constant 0 : index
    %c0_77 = arith.constant 0 : index
    %c0_78 = arith.constant 0 : index
    %c2_79 = arith.constant 2 : index
    %c0_80 = arith.constant 0 : index
    %90 = vector.load %arg4[%c0_76, %c0_77, %c0_78, %c2_79, %c0_80] : memref<1x8x1x4x8xf32, #tpu.memory_space<vmem>>, vector<1x8x1x1x8xf32>
    %91 = vector.shape_cast %90 : vector<1x8x1x1x8xf32> to vector<8x8xf32>
    %92 = arith.truncf %91 : vector<8x8xf32> to vector<8x8xbf16>
    %cst_81 = arith.constant dense<0.000000e+00> : vector<8x8xf32>
    %93 = tpu.matmul %89, %92, %cst_81 {dimension_numbers = #tpu.dot_dimension_numbers<[1], [1], [0], [0], [0, 0, 1, 0], [], []>} : vector<8x8xbf16>, vector<8x8xbf16>, vector<8x8xf32> -> vector<8x8xf32>
    %c2_82 = arith.constant 2 : index
    %c0_83 = arith.constant 0 : index
    %c0_84 = arith.constant 0 : index
    %94 = vector.load %arg7[%c2_82, %c0_83, %c0_84] : memref<4x8x1xf32, #tpu.memory_space<vmem>>, vector<1x8x1xf32>
    %95 = vector.shape_cast %94 : vector<1x8x1xf32> to vector<8x1xf32>
    %cst_85 = arith.constant dense<0xFF800000> : vector<8xf32>
    %96 = vector.multi_reduction <maximumf>, %93, %cst_85 [1] : vector<8x8xf32> to vector<8xf32>
    %97 = vector.shape_cast %96 : vector<8xf32> to vector<8x1xf32>
    %98 = arith.maximumf %95, %97 : vector<8x1xf32>
    %99 = arith.subf %95, %98 : vector<8x1xf32>
    %100 = math.exp %99 : vector<8x1xf32>
    %101 = vector.broadcast %98 : vector<8x1xf32> to vector<8x8xf32>
    %102 = arith.subf %93, %101 : vector<8x8xf32>
    %103 = math.exp %102 : vector<8x8xf32>
    %c2_86 = arith.constant 2 : index
    %c0_87 = arith.constant 0 : index
    %c0_88 = arith.constant 0 : index
    %104 = vector.load %arg8[%c2_86, %c0_87, %c0_88] : memref<4x8x1xf32, #tpu.memory_space<vmem>>, vector<1x8x1xf32>
    %105 = vector.shape_cast %104 : vector<1x8x1xf32> to vector<8x1xf32>
    %106 = arith.mulf %100, %105 : vector<8x1xf32>
    %cst_89 = arith.constant dense<0.000000e+00> : vector<8xf32>
    %107 = vector.multi_reduction <add>, %103, %cst_89 [1] : vector<8x8xf32> to vector<8xf32>
    %108 = vector.shape_cast %107 : vector<8xf32> to vector<8x1xf32>
    %109 = arith.addf %106, %108 : vector<8x1xf32>
    %c2_90 = arith.constant 2 : index
    %c0_91 = arith.constant 0 : index
    %c0_92 = arith.constant 0 : index
    %110 = vector.load %arg8[%c2_90, %c0_91, %c0_92] : memref<4x8x1xf32, #tpu.memory_space<vmem>>, vector<1x8x1xf32>
    %111 = vector.shape_cast %110 : vector<1x8x1xf32> to vector<8x1xf32>
    %112 = vector.shape_cast %109 : vector<8x1xf32> to vector<1x8x1xf32>
    tpu.vector_store %arg8[%c2_90, %c0_91, %c0_92], %112 {strides = array<i32>} : memref<4x8x1xf32, #tpu.memory_space<vmem>>, vector<1x8x1xf32>,
    %113 = arith.truncf %103 : vector<8x8xf32> to vector<8x8xbf16>
    %c0_93 = arith.constant 0 : index
    %c0_94 = arith.constant 0 : index
    %c0_95 = arith.constant 0 : index
    %c2_96 = arith.constant 2 : index
    %c0_97 = arith.constant 0 : index
    %114 = vector.load %arg5[%c0_93, %c0_94, %c0_95, %c2_96, %c0_97] : memref<1x8x1x4x8xf32, #tpu.memory_space<vmem>>, vector<1x8x1x1x8xf32>
    %115 = vector.shape_cast %114 : vector<1x8x1x1x8xf32> to vector<8x8xf32>
    %116 = arith.truncf %115 : vector<8x8xf32> to vector<8x8xbf16>
    %cst_98 = arith.constant dense<0.000000e+00> : vector<8x8xf32>
    %117 = tpu.matmul %113, %116, %cst_98 {dimension_numbers = #tpu.dot_dimension_numbers<[1], [0], [0], [1], [0, 0, 1, 1], [], []>} : vector<8x8xbf16>, vector<8x8xbf16>, vector<8x8xf32> -> vector<8x8xf32>
    %c2_99 = arith.constant 2 : index
    %c0_100 = arith.constant 0 : index
    %c0_101 = arith.constant 0 : index
    %118 = vector.load %arg9[%c2_99, %c0_100, %c0_101] : memref<4x8x8xf32, #tpu.memory_space<vmem>>, vector<1x8x8xf32>
    %119 = vector.shape_cast %118 : vector<1x8x8xf32> to vector<8x8xf32>
    %120 = vector.broadcast %100 : vector<8x1xf32> to vector<8x8xf32>
    %121 = arith.mulf %120, %119 : vector<8x8xf32>
    %122 = arith.addf %121, %117 : vector<8x8xf32>
    %c2_102 = arith.constant 2 : index
    %c0_103 = arith.constant 0 : index
    %c0_104 = arith.constant 0 : index
    %123 = vector.load %arg9[%c2_102, %c0_103, %c0_104] : memref<4x8x8xf32, #tpu.memory_space<vmem>>, vector<1x8x8xf32>
    %124 = vector.shape_cast %123 : vector<1x8x8xf32> to vector<8x8xf32>
    %125 = vector.shape_cast %122 : vector<8x8xf32> to vector<1x8x8xf32>
    tpu.vector_store %arg9[%c2_102, %c0_103, %c0_104], %125 {strides = array<i32>} : memref<4x8x8xf32, #tpu.memory_space<vmem>>, vector<1x8x8xf32>,
    %c2_105 = arith.constant 2 : index
    %c0_106 = arith.constant 0 : index
    %c0_107 = arith.constant 0 : index
    %126 = vector.load %arg7[%c2_105, %c0_106, %c0_107] : memref<4x8x1xf32, #tpu.memory_space<vmem>>, vector<1x8x1xf32>
    %127 = vector.shape_cast %126 : vector<1x8x1xf32> to vector<8x1xf32>
    %128 = vector.shape_cast %98 : vector<8x1xf32> to vector<1x8x1xf32>
    tpu.vector_store %arg7[%c2_105, %c0_106, %c0_107], %128 {strides = array<i32>} : memref<4x8x1xf32, #tpu.memory_space<vmem>>, vector<1x8x1xf32>,
    %c0_108 = arith.constant 0 : index
    %c0_109 = arith.constant 0 : index
    %c0_110 = arith.constant 0 : index
    %c3 = arith.constant 3 : index
    %c0_111 = arith.constant 0 : index
    %129 = vector.load %arg3[%c0_108, %c0_109, %c0_110, %c3, %c0_111] : memref<1x8x1x4x8xf32, #tpu.memory_space<vmem>>, vector<1x8x1x1x8xf32>
    %130 = vector.shape_cast %129 : vector<1x8x1x1x8xf32> to vector<8x8xf32>
    %131 = arith.truncf %130 : vector<8x8xf32> to vector<8x8xbf16>
    %c0_112 = arith.constant 0 : index
    %c0_113 = arith.constant 0 : index
    %c0_114 = arith.constant 0 : index
    %c3_115 = arith.constant 3 : index
    %c0_116 = arith.constant 0 : index
    %132 = vector.load %arg4[%c0_112, %c0_113, %c0_114, %c3_115, %c0_116] : memref<1x8x1x4x8xf32, #tpu.memory_space<vmem>>, vector<1x8x1x1x8xf32>
    %133 = vector.shape_cast %132 : vector<1x8x1x1x8xf32> to vector<8x8xf32>
    %134 = arith.truncf %133 : vector<8x8xf32> to vector<8x8xbf16>
    %cst_117 = arith.constant dense<0.000000e+00> : vector<8x8xf32>
    %135 = tpu.matmul %131, %134, %cst_117 {dimension_numbers = #tpu.dot_dimension_numbers<[1], [1], [0], [0], [0, 0, 1, 0], [], []>} : vector<8x8xbf16>, vector<8x8xbf16>, vector<8x8xf32> -> vector<8x8xf32>
    %c3_118 = arith.constant 3 : index
    %c0_119 = arith.constant 0 : index
    %c0_120 = arith.constant 0 : index
    %136 = vector.load %arg7[%c3_118, %c0_119, %c0_120] : memref<4x8x1xf32, #tpu.memory_space<vmem>>, vector<1x8x1xf32>
    %137 = vector.shape_cast %136 : vector<1x8x1xf32> to vector<8x1xf32>
    %cst_121 = arith.constant dense<0xFF800000> : vector<8xf32>
    %138 = vector.multi_reduction <maximumf>, %135, %cst_121 [1] : vector<8x8xf32> to vector<8xf32>
    %139 = vector.shape_cast %138 : vector<8xf32> to vector<8x1xf32>
    %140 = arith.maximumf %137, %139 : vector<8x1xf32>
    %141 = arith.subf %137, %140 : vector<8x1xf32>
    %142 = math.exp %141 : vector<8x1xf32>
    %143 = vector.broadcast %140 : vector<8x1xf32> to vector<8x8xf32>
    %144 = arith.subf %135, %143 : vector<8x8xf32>
    %145 = math.exp %144 : vector<8x8xf32>
    %c3_122 = arith.constant 3 : index
    %c0_123 = arith.constant 0 : index
    %c0_124 = arith.constant 0 : index
    %146 = vector.load %arg8[%c3_122, %c0_123, %c0_124] : memref<4x8x1xf32, #tpu.memory_space<vmem>>, vector<1x8x1xf32>
    %147 = vector.shape_cast %146 : vector<1x8x1xf32> to vector<8x1xf32>
    %148 = arith.mulf %142, %147 : vector<8x1xf32>
    %cst_125 = arith.constant dense<0.000000e+00> : vector<8xf32>
    %149 = vector.multi_reduction <add>, %145, %cst_125 [1] : vector<8x8xf32> to vector<8xf32>
    %150 = vector.shape_cast %149 : vector<8xf32> to vector<8x1xf32>
    %151 = arith.addf %148, %150 : vector<8x1xf32>
    %c3_126 = arith.constant 3 : index
    %c0_127 = arith.constant 0 : index
    %c0_128 = arith.constant 0 : index
    %152 = vector.load %arg8[%c3_126, %c0_127, %c0_128] : memref<4x8x1xf32, #tpu.memory_space<vmem>>, vector<1x8x1xf32>
    %153 = vector.shape_cast %152 : vector<1x8x1xf32> to vector<8x1xf32>
    %154 = vector.shape_cast %151 : vector<8x1xf32> to vector<1x8x1xf32>
    tpu.vector_store %arg8[%c3_126, %c0_127, %c0_128], %154 {strides = array<i32>} : memref<4x8x1xf32, #tpu.memory_space<vmem>>, vector<1x8x1xf32>,
    %155 = arith.truncf %145 : vector<8x8xf32> to vector<8x8xbf16>
    %c0_129 = arith.constant 0 : index
    %c0_130 = arith.constant 0 : index
    %c0_131 = arith.constant 0 : index
    %c3_132 = arith.constant 3 : index
    %c0_133 = arith.constant 0 : index
    %156 = vector.load %arg5[%c0_129, %c0_130, %c0_131, %c3_132, %c0_133] : memref<1x8x1x4x8xf32, #tpu.memory_space<vmem>>, vector<1x8x1x1x8xf32>
    %157 = vector.shape_cast %156 : vector<1x8x1x1x8xf32> to vector<8x8xf32>
    %158 = arith.truncf %157 : vector<8x8xf32> to vector<8x8xbf16>
    %cst_134 = arith.constant dense<0.000000e+00> : vector<8x8xf32>
    %159 = tpu.matmul %155, %158, %cst_134 {dimension_numbers = #tpu.dot_dimension_numbers<[1], [0], [0], [1], [0, 0, 1, 1], [], []>} : vector<8x8xbf16>, vector<8x8xbf16>, vector<8x8xf32> -> vector<8x8xf32>
    %c3_135 = arith.constant 3 : index
    %c0_136 = arith.constant 0 : index
    %c0_137 = arith.constant 0 : index
    %160 = vector.load %arg9[%c3_135, %c0_136, %c0_137] : memref<4x8x8xf32, #tpu.memory_space<vmem>>, vector<1x8x8xf32>
    %161 = vector.shape_cast %160 : vector<1x8x8xf32> to vector<8x8xf32>
    %162 = vector.broadcast %142 : vector<8x1xf32> to vector<8x8xf32>
    %163 = arith.mulf %162, %161 : vector<8x8xf32>
    %164 = arith.addf %163, %159 : vector<8x8xf32>
    %c3_138 = arith.constant 3 : index
    %c0_139 = arith.constant 0 : index
    %c0_140 = arith.constant 0 : index
    %165 = vector.load %arg9[%c3_138, %c0_139, %c0_140] : memref<4x8x8xf32, #tpu.memory_space<vmem>>, vector<1x8x8xf32>
    %166 = vector.shape_cast %165 : vector<1x8x8xf32> to vector<8x8xf32>
    %167 = vector.shape_cast %164 : vector<8x8xf32> to vector<1x8x8xf32>
    tpu.vector_store %arg9[%c3_138, %c0_139, %c0_140], %167 {strides = array<i32>} : memref<4x8x8xf32, #tpu.memory_space<vmem>>, vector<1x8x8xf32>,
    %c3_141 = arith.constant 3 : index
    %c0_142 = arith.constant 0 : index
    %c0_143 = arith.constant 0 : index
    %168 = vector.load %arg7[%c3_141, %c0_142, %c0_143] : memref<4x8x1xf32, #tpu.memory_space<vmem>>, vector<1x8x1xf32>
    %169 = vector.shape_cast %168 : vector<1x8x1xf32> to vector<8x1xf32>
    %170 = vector.shape_cast %140 : vector<8x1xf32> to vector<1x8x1xf32>
    tpu.vector_store %arg7[%c3_141, %c0_142, %c0_143], %170 {strides = array<i32>} : memref<4x8x1xf32, #tpu.memory_space<vmem>>, vector<1x8x1xf32>,
    %c0_i32_144 = arith.constant 0 : i32
    %171 = arith.cmpi eq, %arg2, %c0_i32_144 : i32
    %172 = arith.extui %171 : i1 to i32
    %c0_i32_145 = arith.constant 0 : i32
    %173 = arith.cmpi ne, %172, %c0_i32_145 : i32
    scf.if %173 {
      %c0_146 = arith.constant 0 : index
      %c0_147 = arith.constant 0 : index
      %c0_148 = arith.constant 0 : index
      %174 = vector.load %arg8[%c0_146, %c0_147, %c0_148] : memref<4x8x1xf32, #tpu.memory_space<vmem>>, vector<1x8x1xf32>
      %175 = vector.shape_cast %174 : vector<1x8x1xf32> to vector<8x1xf32>
      %176 = tpu.reciprocal %175 {approx = true} : vector<8x1xf32> -> vector<8x1xf32>
      %cst_149 = arith.constant 0.176776692 : f32
      %177 = vector.broadcast %cst_149 : f32 to vector<8x1xf32>
      %178 = arith.mulf %176, %177 : vector<8x1xf32>
      %c0_150 = arith.constant 0 : index
      %c0_151 = arith.constant 0 : index
      %c0_152 = arith.constant 0 : index
      %179 = vector.load %arg9[%c0_150, %c0_151, %c0_152] : memref<4x8x8xf32, #tpu.memory_space<vmem>>, vector<1x8x8xf32>
      %180 = vector.shape_cast %179 : vector<1x8x8xf32> to vector<8x8xf32>
      %181 = vector.broadcast %178 : vector<8x1xf32> to vector<8x8xf32>
      %182 = arith.mulf %180, %181 : vector<8x8xf32>
      %c1_153 = arith.constant 1 : index
      %c0_154 = arith.constant 0 : index
      %c0_155 = arith.constant 0 : index
      %183 = vector.load %arg8[%c1_153, %c0_154, %c0_155] : memref<4x8x1xf32, #tpu.memory_space<vmem>>, vector<1x8x1xf32>
      %184 = vector.shape_cast %183 : vector<1x8x1xf32> to vector<8x1xf32>
      %185 = tpu.reciprocal %184 {approx = true} : vector<8x1xf32> -> vector<8x1xf32>
      %cst_156 = arith.constant 0.176776692 : f32
      %186 = vector.broadcast %cst_156 : f32 to vector<8x1xf32>
      %187 = arith.mulf %185, %186 : vector<8x1xf32>
      %c1_157 = arith.constant 1 : index
      %c0_158 = arith.constant 0 : index
      %c0_159 = arith.constant 0 : index
      %188 = vector.load %arg9[%c1_157, %c0_158, %c0_159] : memref<4x8x8xf32, #tpu.memory_space<vmem>>, vector<1x8x8xf32>
      %189 = vector.shape_cast %188 : vector<1x8x8xf32> to vector<8x8xf32>
      %190 = vector.broadcast %187 : vector<8x1xf32> to vector<8x8xf32>
      %191 = arith.mulf %189, %190 : vector<8x8xf32>
      %c2_160 = arith.constant 2 : index
      %c0_161 = arith.constant 0 : index
      %c0_162 = arith.constant 0 : index
      %192 = vector.load %arg8[%c2_160, %c0_161, %c0_162] : memref<4x8x1xf32, #tpu.memory_space<vmem>>, vector<1x8x1xf32>
      %193 = vector.shape_cast %192 : vector<1x8x1xf32> to vector<8x1xf32>
      %194 = tpu.reciprocal %193 {approx = true} : vector<8x1xf32> -> vector<8x1xf32>
      %cst_163 = arith.constant 0.176776692 : f32
      %195 = vector.broadcast %cst_163 : f32 to vector<8x1xf32>
      %196 = arith.mulf %194, %195 : vector<8x1xf32>
      %c2_164 = arith.constant 2 : index
      %c0_165 = arith.constant 0 : index
      %c0_166 = arith.constant 0 : index
      %197 = vector.load %arg9[%c2_164, %c0_165, %c0_166] : memref<4x8x8xf32, #tpu.memory_space<vmem>>, vector<1x8x8xf32>
      %198 = vector.shape_cast %197 : vector<1x8x8xf32> to vector<8x8xf32>
      %199 = vector.broadcast %196 : vector<8x1xf32> to vector<8x8xf32>
      %200 = arith.mulf %198, %199 : vector<8x8xf32>
      %c3_167 = arith.constant 3 : index
      %c0_168 = arith.constant 0 : index
      %c0_169 = arith.constant 0 : index
      %201 = vector.load %arg8[%c3_167, %c0_168, %c0_169] : memref<4x8x1xf32, #tpu.memory_space<vmem>>, vector<1x8x1xf32>
      %202 = vector.shape_cast %201 : vector<1x8x1xf32> to vector<8x1xf32>
      %203 = tpu.reciprocal %202 {approx = true} : vector<8x1xf32> -> vector<8x1xf32>
      %cst_170 = arith.constant 0.176776692 : f32
      %204 = vector.broadcast %cst_170 : f32 to vector<8x1xf32>
      %205 = arith.mulf %203, %204 : vector<8x1xf32>
      %c3_171 = arith.constant 3 : index
      %c0_172 = arith.constant 0 : index
      %c0_173 = arith.constant 0 : index
      %206 = vector.load %arg9[%c3_171, %c0_172, %c0_173] : memref<4x8x8xf32, #tpu.memory_space<vmem>>, vector<1x8x8xf32>
      %207 = vector.shape_cast %206 : vector<1x8x8xf32> to vector<8x8xf32>
      %208 = vector.broadcast %205 : vector<8x1xf32> to vector<8x8xf32>
      %209 = arith.mulf %207, %208 : vector<8x8xf32>
      %210 = tpu.concatenate %182, %191, %200, %209 in 1 : vector<8x8xf32>, vector<8x8xf32>, vector<8x8xf32>, vector<8x8xf32> -> vector<8x32xf32>
      %c0_174 = arith.constant 0 : index
      %c0_175 = arith.constant 0 : index
      %c0_176 = arith.constant 0 : index
      %211 = vector.load %arg6[%c0_174, %c0_175, %c0_176] : memref<1x8x32xf32, #tpu.memory_space<vmem>>, vector<1x8x32xf32>
      %212 = vector.shape_cast %211 : vector<1x8x32xf32> to vector<8x32xf32>
      %213 = vector.shape_cast %210 : vector<8x32xf32> to vector<1x8x32xf32>
      tpu.vector_store %arg6[%c0_174, %c0_175, %c0_176], %213 {strides = array<i32>} : memref<1x8x32xf32, #tpu.memory_space<vmem>>, vector<1x8x32xf32>,
    } else {
    }
    return
  }
  func.func @transform_0(%arg0: i32, %arg1: i32, %arg2: i32) -> (i32, i32, i32, i32, i32) {
    %c0_i32 = arith.constant 0 : i32
    %c0_i32_0 = arith.constant 0 : i32
    %c0_i32_1 = arith.constant 0 : i32
    %c0_i32_2 = arith.constant 0 : i32
    return %arg0, %arg1, %c0_i32, %c0_i32_0, %c0_i32_1 : i32, i32, i32, i32, i32
  }
  func.func @transform_1(%arg0: i32, %arg1: i32, %arg2: i32) -> (i32, i32, i32, i32, i32) {
    %c1_i32 = arith.constant 1 : i32
    %c0_i32 = arith.constant 0 : i32
    %c0_i32_0 = arith.constant 0 : i32
    %c0_i32_1 = arith.constant 0 : i32
    return %arg0, %arg2, %c1_i32, %c0_i32, %c0_i32_0 : i32, i32, i32, i32, i32
  }
  func.func @transform_2(%arg0: i32, %arg1: i32, %arg2: i32) -> (i32, i32, i32, i32, i32) {
    %c2_i32 = arith.constant 2 : i32
    %c0_i32 = arith.constant 0 : i32
    %c0_i32_0 = arith.constant 0 : i32
    %c0_i32_1 = arith.constant 0 : i32
    return %arg0, %arg2, %c2_i32, %c0_i32, %c0_i32_0 : i32, i32, i32, i32, i32
  }
  func.func @transform_3(%arg0: i32, %arg1: i32, %arg2: i32) -> (i32, i32, i32) {
    %c0_i32 = arith.constant 0 : i32
    %c0_i32_0 = arith.constant 0 : i32
    return %arg0, %arg1, %c0_i32 : i32, i32, i32
  }
}

</mosaic_0001>

<llo_original>
// kernel: multi_head_attention.3
$region0: #{multi_head_attention.3}
  #allocation0 [shape = 'u32[]', space=smem, size = 0x4, offset = 0x4, fixed_abs, tag = 'smem constant byte address 0x4 - core index']
  #allocation1 [shape = 'u32[144,128]{1,0:T(1,128)}', space=vmem, size = 0x12000, scoped, tag = 'internal scratch']
  #allocation2 [shape = 'f32[16,96]{1,0:T(8,128)}', space=vmem, size = 0x2000, scoped, tag = 'scratch operand']
  %s0 = inlined_call_operand.hbm [shape: f32[16,32], index: 0, kind: input, shape index: {}]
  %s1 = inlined_call_operand.hbm [shape: bf16[32,96], index: 1, kind: input, shape index: {}]
  %s2 = inlined_call_operand.vmem [shape: f32[1,96], index: 2, kind: input, shape index: {}]
  %s3 = inlined_call_operand.vmem [shape: f32[16,96], index: 3, kind: output, shape index: {}]
  %s4 = sld [smem:[#allocation0]]
  $region38: #{multi_head_attention.3} parent=0
    _
  %s6 = ssub.s32 1, %s4
  %s7 = scalar_select 0, %s6, %s4
  $region1: #{multi_head_attention.3} parent=0
    #allocation3 [shape = 'u8[8192]{0}', space=vmem, size = 0x2000, scoped, tag = 'input window, operand 0, single buffered']
    #allocation4 [shape = 's32[1]{0}', space=sflag, size = 0x4, scoped, tag = 'scoped memory for multi_head_attention.3']
    #allocation5 [shape = 'u8[8192]{0}', space=vmem, size = 0x2000, scoped, tag = 'input window, operand 1, single buffered']
    #allocation6 [shape = 's32[1]{0}', space=sflag, size = 0x4, scoped, tag = 'scoped memory for multi_head_attention.3']
    %8 = vsyncpa [#allocation4], 0
    %9 = vsyncpa [#allocation6], 0
    // Predicated region
    $region2: #{multi_head_attention.3} parent=1 // pred_check
      _
    $region3: #{multi_head_attention.3} parent=1 // pred_check_branch
      %11 = sbr.rel (0) target = $region5
    $region4: #{multi_head_attention.3} parent=1 // pred_region
      %s13 = ssub.s32 256, 256
      %14 = vsyncadd [#allocation4], %s13
      %s15 = sshll.u32 [#allocation3], 4
      %s16 = int_to_ptr.vmem [resolvable:$true] %s15
      %21 = dma.hbm_to_vmem [thread:$0]  %s0, 256, %s16, [#allocation4], 128, 128, 8
    $region5: #{multi_head_attention.3} parent=1 // pred_fallthru
      _
    // Predicated region
    $region6: #{multi_head_attention.3} parent=1 // pred_check
      _
    $region7: #{multi_head_attention.3} parent=1 // pred_check_branch
      %23 = sbr.rel (0) target = $region9
    $region8: #{multi_head_attention.3} parent=1 // pred_region
      %s25 = ssub.s32 256, 256
      %26 = vsyncadd [#allocation6], %s25
      %s27 = sshll.u32 [#allocation5], 4
      %s28 = int_to_ptr.vmem [resolvable:$true] %s27
      %33 = dma.hbm_to_vmem [thread:$0]  %s1, 256, %s28, [#allocation6], 64, 64, 4
    $region9: #{multi_head_attention.3} parent=1 // pred_fallthru
      _
    // Predicated region
    $region10: #{multi_head_attention.3} parent=1 // pred_check
      _
    $region11: #{multi_head_attention.3} parent=1 // pred_check_branch
      %35 = sbr.rel (0) target = $region13
    $region12: #{multi_head_attention.3} parent=1 // pred_region
      _
    $region13: #{multi_head_attention.3} parent=1 // pred_fallthru
      _
    // Predicated region
    $region14: #{multi_head_attention.3} parent=1 // pred_check
      _
    $region15: #{multi_head_attention.3} parent=1 // pred_check_branch
      %37 = sbr.rel (0) target = $region17
    $region16: #{multi_head_attention.3} parent=1 // pred_region
      %38 = dma.done [#allocation4], 256
    $region17: #{multi_head_attention.3} parent=1 // pred_fallthru
      _
    // Predicated region
    $region18: #{multi_head_attention.3} parent=1 // pred_check
      _
    $region19: #{multi_head_attention.3} parent=1 // pred_check_branch
      %40 = sbr.rel (0) target = $region21
    $region20: #{multi_head_attention.3} parent=1 // pred_region
      %41 = dma.done [#allocation6], 256
    $region21: #{multi_head_attention.3} parent=1 // pred_fallthru
      _
    %p43 = scmp.eq.s32.totalorder 0, 0
    // Predicated region
    $region22: #{multi_head_attention.3} parent=1 // pred_check
      %p44 = pneg %p43
    $region23: #{multi_head_attention.3} parent=1 // pred_check_branch
      %46 = sbr.rel (%p44) target = $region25
    $region24: #{multi_head_attention.3} parent=1 // pred_region
      %vm47 = vcmask 785408
      %48 = vst.msk [vmem:[#allocation2] sm:$0xff] %vm47, 0.0
      %49 = vst.msk [vmem:[#allocation2 + $0x8] sm:$0xff] %vm47, 0.0
    $region25: #{multi_head_attention.3} parent=1 // pred_fallthru
      _
    %v50 = vld [vmem:[#allocation2] sm:$0xff]
    %v51 = vld [vmem:[#allocation2 + $0x8] sm:$0xff]
    %v52 = vld [vmem:[#allocation3] sm:$0xff]
    %v53 = vld [vmem:[#allocation3 + $0x8] sm:$0xff]
    %v54 = vpack.c.bf16 %v53, %v52
    %v55 = vld [vmem:[#allocation5] sm:$0xf]
    %v56 = vld [vmem:[#allocation5 + $0x4] sm:$0xf]
    %v57 = vld [vmem:[#allocation5 + $0x8] sm:$0xf]
    %v58 = vld [vmem:[#allocation5 + $0xc] sm:$0xf]
    %v63 = vunpack.c.l.b16 %v55
    %v64 = vunpack.c.l.b16 %v56
    %v65 = vunpack.c.l.b16 %v57
    %v66 = vunpack.c.l.b16 %v58
    %v67 = vpack.c.b16 %v64, %v63
    %v68 = vpack.c.b16 %v66, %v65
    %vm71 = vcmask 261120
    %v73 = vsel %vm71, %v54, 0
    %75 = vmatprep.subr.bf16.mxu0 0
    %76 = vmatpush1.bf16.msra.mxu0 0
    %77 = vmatprep.subr.bf16.mxu0 0
    %78 = vmatpush1.bf16.msra.mxu0 0
    %79 = vmatprep.subr.bf16.mxu0 0
    %80 = vmatpush1.bf16.msra.mxu0 0
    %81 = vmatprep.subr.bf16.mxu0 0
    %82 = vmatpush1.bf16.msra.mxu0 0
    %83 = vmatprep.subr.bf16.mxu0 0
    %84 = vmatpush1.bf16.msra.mxu0 0
    %85 = vmatprep.subr.bf16.mxu0 0
    %86 = vmatpush1.bf16.msra.mxu0 0
    %87 = vmatprep.subr.bf16.mxu0 0
    %88 = vmatpush1.bf16.msra.mxu0 %v68
    %89 = vmatprep.subr.bf16.mxu0 0
    %90 = vmatpush1.bf16.msra.mxu0 %v67
    %91 = vmatprep.subr.bf16.mxu0 0
    %92 = vmatpush2.bf16.msra.mxu0 0
    %93 = vmatprep.subr.bf16.mxu0 0
    %94 = vmatpush2.bf16.msra.mxu0 0
    %95 = vmatprep.subr.bf16.mxu0 0
    %96 = vmatpush2.bf16.msra.mxu0 0
    %97 = vmatprep.subr.bf16.mxu0 0
    %98 = vmatpush2.bf16.msra.mxu0 0
    %99 = vmatprep.subr.bf16.mxu0 0
    %100 = vmatpush2.bf16.msra.mxu0 0
    %101 = vmatprep.subr.bf16.mxu0 0
    %102 = vmatpush2.bf16.msra.mxu0 0
    %103 = vmatprep.subr.bf16.mxu0 0
    %104 = vmatpush2.bf16.msra.mxu0 0
    %105 = vmatprep.subr.bf16.mxu0 0
    %106 = vmatpush2.bf16.msra.mxu0 0
    %107 = vmatprep.mubr.bf16.mxu0 0
    %108 = vmatmul.mubr.bf16.gmra.mxu0 %v73
    %v109 = vpop.f32.mrf.mxu0
    %v110 = vadd.f32 0.0, %v109
    %v111 = vpop.f32.mrf.mxu0
    %v112 = vpop.f32.mrf.mxu0
    %v113 = vadd.f32 0.0, %v112
    %v114 = vpop.f32.mrf.mxu0
    %115 = vdwg.mxu0
    %v116 = vadd.f32 %v50, %v110
    %v117 = vadd.f32 %v51, %v113
    %vm118 = vcmask 785408
    %119 = vst.msk [vmem:[#allocation2] sm:$0xff] %vm118, %v116
    %120 = vst.msk [vmem:[#allocation2 + $0x8] sm:$0xff] %vm118, %v117
    // Predicated region
    $region26: #{multi_head_attention.3} parent=1 // pred_check
      %p121 = pneg %p43
    $region27: #{multi_head_attention.3} parent=1 // pred_check_branch
      %123 = sbr.rel (%p121) target = $region29
    $region28: #{multi_head_attention.3} parent=1 // pred_region
      %v124 = vld [vmem:[#allocation2] sm:$0xff]
      %v125 = vld [vmem:[#allocation2 + $0x8] sm:$0xff]
      %v126 = vld [vmem:[%s2] sm:$0x1]
      %v128 = vlaneseq
      %v129 = vshrl.u32 %v128, 7
      %v130 = vsub.s32 0, %v129
      %v131 = vrot.slane %v126, %v130
      %v133 = vadd.f32 %v124, %v131
      %v134 = vadd.f32 %v125, %v131
      %135 = vst.msk [vmem:[%s3] sm:$0xff] %vm118, %v133
      %136 = vst.msk [vmem:[%s3 + $0x8] sm:$0xff] %vm118, %v134
    $region29: #{multi_head_attention.3} parent=1 // pred_fallthru
      _
    // Predicated region
    $region30: #{multi_head_attention.3} parent=1 // pred_check
      _
    $region31: #{multi_head_attention.3} parent=1 // pred_check_branch
      %138 = sbr.rel (0) target = $region33
    $region32: #{multi_head_attention.3} parent=1 // pred_region
      _
    $region33: #{multi_head_attention.3} parent=1 // pred_fallthru
      _
    // Predicated region
    $region34: #{multi_head_attention.3} parent=1 // pred_check
      _
    $region35: #{multi_head_attention.3} parent=1 // pred_check_branch
      %140 = sbr.rel (0) target = $region37
    $region36: #{multi_head_attention.3} parent=1 // pred_region
      _
    $region37: #{multi_head_attention.3} parent=1 // pred_fallthru
      _
    %141 = vsyncpa [#allocation4], 1
    %142 = vsyncpa [#allocation6], 1

// kernel: multi_head_attention.5
$region0: #{multi_head_attention.5}
  #allocation0 [shape = 'u32[]', space=smem, size = 0x4, offset = 0x4, fixed_abs, tag = 'smem constant byte address 0x4 - core index']
  #allocation1 [shape = 'u32[144,128]{1,0:T(1,128)}', space=vmem, size = 0x12000, scoped, tag = 'internal scratch']
  #allocation2 [shape = 'f32[16,32]{1,0:T(8,128)}', space=vmem, size = 0x2000, scoped, tag = 'scratch operand']
  %s0 = inlined_call_operand.vmem [shape: f32[16,32], index: 0, kind: input, shape index: {}]
  %s1 = inlined_call_operand.vmem [shape: bf16[32,32], index: 1, kind: input, shape index: {}]
  %s2 = inlined_call_operand.vmem [shape: f32[1,32], index: 2, kind: input, shape index: {}]
  %s3 = inlined_call_operand.hbm [shape: f32[16,32], index: 3, kind: output, shape index: {}]
  %s4 = sld [smem:[#allocation0]]
  $region30: #{multi_head_attention.5} parent=0
    _
  %s6 = ssub.s32 1, %s4
  %s7 = scalar_select 0, %s6, %s4
  $region1: #{multi_head_attention.5} parent=0
    #allocation3 [shape = 'u8[8192]{0}', space=vmem, size = 0x2000, scoped, tag = 'output window, operand 0, single buffered']
    #allocation4 [shape = 's32[1]{0}', space=sflag, size = 0x4, scoped, tag = 'scoped memory for multi_head_attention.5']
    %8 = vsyncpa [#allocation4], 0
    // Predicated region
    $region2: #{multi_head_attention.5} parent=1 // pred_check
      _
    $region3: #{multi_head_attention.5} parent=1 // pred_check_branch
      %10 = sbr.rel (0) target = $region5
    $region4: #{multi_head_attention.5} parent=1 // pred_region
      _
    $region5: #{multi_head_attention.5} parent=1 // pred_fallthru
      _
    // Predicated region
    $region6: #{multi_head_attention.5} parent=1 // pred_check
      _
    $region7: #{multi_head_attention.5} parent=1 // pred_check_branch
      %12 = sbr.rel (0) target = $region9
    $region8: #{multi_head_attention.5} parent=1 // pred_region
      _
    $region9: #{multi_head_attention.5} parent=1 // pred_fallthru
      _
    // Predicated region
    $region10: #{multi_head_attention.5} parent=1 // pred_check
      _
    $region11: #{multi_head_attention.5} parent=1 // pred_check_branch
      %14 = sbr.rel (0) target = $region13
    $region12: #{multi_head_attention.5} parent=1 // pred_region
      _
    $region13: #{multi_head_attention.5} parent=1 // pred_fallthru
      _
    %p16 = scmp.eq.s32.totalorder 0, 0
    // Predicated region
    $region14: #{multi_head_attention.5} parent=1 // pred_check
      %p17 = pneg %p16
    $region15: #{multi_head_attention.5} parent=1 // pred_check_branch
      %19 = sbr.rel (%p17) target = $region17
    $region16: #{multi_head_attention.5} parent=1 // pred_region
      %vm20 = vcmask 261120
      %21 = vst.msk [vmem:[#allocation2] sm:$0xff] %vm20, 0.0
      %22 = vst.msk [vmem:[#allocation2 + $0x8] sm:$0xff] %vm20, 0.0
    $region17: #{multi_head_attention.5} parent=1 // pred_fallthru
      _
    %v23 = vld [vmem:[#allocation2] sm:$0xff]
    %v24 = vld [vmem:[#allocation2 + $0x8] sm:$0xff]
    %v25 = vld [vmem:[%s0] sm:$0xff]
    %v26 = vld [vmem:[%s0 + $0x8] sm:$0xff]
    %v27 = vpack.c.bf16 %v26, %v25
    %v28 = vld [vmem:[%s1] sm:$0xf]
    %v29 = vld [vmem:[%s1 + $0x4] sm:$0xf]
    %v30 = vld [vmem:[%s1 + $0x8] sm:$0xf]
    %v31 = vld [vmem:[%s1 + $0xc] sm:$0xf]
    %v36 = vunpack.c.l.b16 %v28
    %v37 = vunpack.c.l.b16 %v29
    %v38 = vunpack.c.l.b16 %v30
    %v39 = vunpack.c.l.b16 %v31
    %v40 = vpack.c.b16 %v37, %v36
    %v41 = vpack.c.b16 %v39, %v38
    %vm44 = vcmask 261120
    %v46 = vsel %vm44, %v27, 0
    %48 = vmatprep.subr.bf16.mxu0 0
    %49 = vmatpush1.bf16.msra.mxu0 0
    %50 = vmatprep.subr.bf16.mxu0 0
    %51 = vmatpush1.bf16.msra.mxu0 0
    %52 = vmatprep.subr.bf16.mxu0 0
    %53 = vmatpush1.bf16.msra.mxu0 0
    %54 = vmatprep.subr.bf16.mxu0 0
    %55 = vmatpush1.bf16.msra.mxu0 0
    %56 = vmatprep.subr.bf16.mxu0 0
    %57 = vmatpush1.bf16.msra.mxu0 0
    %58 = vmatprep.subr.bf16.mxu0 0
    %59 = vmatpush1.bf16.msra.mxu0 0
    %60 = vmatprep.subr.bf16.mxu0 0
    %61 = vmatpush1.bf16.msra.mxu0 %v41
    %62 = vmatprep.subr.bf16.mxu0 0
    %63 = vmatpush1.bf16.msra.mxu0 %v40
    %64 = vmatprep.subr.bf16.mxu0 0
    %65 = vmatpush2.bf16.msra.mxu0 0
    %66 = vmatprep.subr.bf16.mxu0 0
    %67 = vmatpush2.bf16.msra.mxu0 0
    %68 = vmatprep.subr.bf16.mxu0 0
    %69 = vmatpush2.bf16.msra.mxu0 0
    %70 = vmatprep.subr.bf16.mxu0 0
    %71 = vmatpush2.bf16.msra.mxu0 0
    %72 = vmatprep.subr.bf16.mxu0 0
    %73 = vmatpush2.bf16.msra.mxu0 0
    %74 = vmatprep.subr.bf16.mxu0 0
    %75 = vmatpush2.bf16.msra.mxu0 0
    %76 = vmatprep.subr.bf16.mxu0 0
    %77 = vmatpush2.bf16.msra.mxu0 0
    %78 = vmatprep.subr.bf16.mxu0 0
    %79 = vmatpush2.bf16.msra.mxu0 0
    %80 = vmatprep.mubr.bf16.mxu0 0
    %81 = vmatmul.mubr.bf16.gmra.mxu0 %v46
    %v82 = vpop.f32.mrf.mxu0
    %v83 = vadd.f32 0.0, %v82
    %v84 = vpop.f32.mrf.mxu0
    %v85 = vpop.f32.mrf.mxu0
    %v86 = vadd.f32 0.0, %v85
    %v87 = vpop.f32.mrf.mxu0
    %88 = vdwg.mxu0
    %v89 = vadd.f32 %v23, %v83
    %v90 = vadd.f32 %v24, %v86
    %91 = vst.msk [vmem:[#allocation2] sm:$0xff] %vm44, %v89
    %92 = vst.msk [vmem:[#allocation2 + $0x8] sm:$0xff] %vm44, %v90
    // Predicated region
    $region18: #{multi_head_attention.5} parent=1 // pred_check
      %p93 = pneg %p16
    $region19: #{multi_head_attention.5} parent=1 // pred_check_branch
      %95 = sbr.rel (%p93) target = $region21
    $region20: #{multi_head_attention.5} parent=1 // pred_region
      %v96 = vld [vmem:[#allocation2] sm:$0xff]
      %v97 = vld [vmem:[#allocation2 + $0x8] sm:$0xff]
      %v98 = vld [vmem:[%s2] sm:$0x1]
      %v100 = vlaneseq
      %v101 = vshrl.u32 %v100, 7
      %v102 = vsub.s32 0, %v101
      %v103 = vrot.slane %v98, %v102
      %v105 = vadd.f32 %v96, %v103
      %v106 = vadd.f32 %v97, %v103
      %107 = vst.msk [vmem:[#allocation3] sm:$0xff] %vm44, %v105
      %108 = vst.msk [vmem:[#allocation3 + $0x8] sm:$0xff] %vm44, %v106
    $region21: #{multi_head_attention.5} parent=1 // pred_fallthru
      _
    // Predicated region
    $region22: #{multi_head_attention.5} parent=1 // pred_check
      _
    $region23: #{multi_head_attention.5} parent=1 // pred_check_branch
      %110 = sbr.rel (0) target = $region25
    $region24: #{multi_head_attention.5} parent=1 // pred_region
      %s112 = ssub.s32 256, 256
      %113 = vsyncadd [#allocation4], %s112
      %s114 = sshll.u32 [#allocation3], 4
      %s115 = int_to_ptr.vmem [resolvable:$true] %s114
      %120 = dma.vmem_to_hbm [thread:$0]  %s115, 256, %s3, [#allocation4], 128, 128, 8
    $region25: #{multi_head_attention.5} parent=1 // pred_fallthru
      _
    // Predicated region
    $region26: #{multi_head_attention.5} parent=1 // pred_check
      _
    $region27: #{multi_head_attention.5} parent=1 // pred_check_branch
      %122 = sbr.rel (0) target = $region29
    $region28: #{multi_head_attention.5} parent=1 // pred_region
      %123 = dma.done [#allocation4], 256
    $region29: #{multi_head_attention.5} parent=1 // pred_fallthru
      _
    %124 = vsyncpa [#allocation4], 1

// kernel: multi_head_attention.4
$region0: #{multi_head_attention.4}
  #allocation0 [shape = 'u32[]', space=smem, size = 0x4, offset = 0x4, fixed_abs, tag = 'smem constant byte address 0x4 - core index']
  #allocation1 [shape = 'u32[144,128]{1,0:T(1,128)}', space=vmem, size = 0x12000, scoped, tag = 'internal scratch']
  #allocation2 [shape = 'f32[4,8,1]{2,1,0:T(8,128)}', space=vmem, size = 0x4000, scoped, tag = 'scratch operand']
  #allocation3 [shape = 'f32[4,8,1]{2,1,0:T(8,128)}', space=vmem, size = 0x4000, scoped, tag = 'scratch operand']
  #allocation4 [shape = 'f32[4,8,8]{2,1,0:T(8,128)}', space=vmem, size = 0x4000, scoped, tag = 'scratch operand']
  %s0 = inlined_call_operand.vmem [shape: f32[2,8,3,4,8], index: 0, kind: input, shape index: {}, may-alias: {0,1,2}]
  %s1 = inlined_call_operand.vmem [shape: f32[2,8,3,4,8], index: 1, kind: input, shape index: {}, may-alias: {0,1,2}]
  %s2 = inlined_call_operand.vmem [shape: f32[2,8,3,4,8], index: 2, kind: input, shape index: {}, may-alias: {0,1,2}]
  %s3 = inlined_call_operand.vmem [shape: f32[2,8,32], index: 3, kind: output, shape index: {}]
  %s4 = sld [smem:[#allocation0]]
  $region176: #{multi_head_attention.4} parent=0
    _
  %s6 = ssub.s32 1, %s4
  %s7 = scalar_select 0, %s6, %s4
  $region1: #{multi_head_attention.4} parent=0
    #allocation5 [shape = 'u8[32768]{0}', space=vmem, size = 0x8000, scoped, tag = 'input window, operand 0']
    #allocation6 [shape = 'u8[32768]{0}', space=vmem, size = 0x8000, scoped, tag = 'input window, operand 1']
    #allocation7 [shape = 'u8[32768]{0}', space=vmem, size = 0x8000, scoped, tag = 'input window, operand 2']
    loop: start=0, step=1, limit=4
    $region2: #{multi_head_attention.4} parent=1 // loop_pre_header
      _
    $region3: #{multi_head_attention.4} parent=1 // loop_header
      %s9 = sphi 0, %s13
      %p10 = scmp.ge.s32.totalorder %s9, 4
      %s16 = sphi 0, %s35
      %s17 = sphi 0, %s31
      %s18 = sphi 0, %s27
      %s19 = sphi 0, %s16
      %s20 = sphi 0, %s17
      %s21 = sphi 0, %s18
      %s22 = sphi 0, %s19
      %s23 = sphi 0, %s20
      %s24 = sphi 0, %s21
      %s40 = sphi 0, %s42
      %s43 = sphi 0, %s40
      %s44 = sphi 0, %s43
      %s60 = sphi 0, %s44
      %s68 = sphi 0, %s70
      %s71 = sphi 0, %s68
      %s72 = sphi 0, %s71
      %s88 = sphi 0, %s72
      %s96 = sphi 0, %s98
      %s99 = sphi 0, %s96
      %s100 = sphi 0, %s99
      %s116 = sphi 0, %s100
      %s124 = sphi 0, %s126
      %s127 = sphi 0, %s124
      %s128 = sphi 0, %s127
      %s144 = sphi 0, %s128
    $region4: #{multi_head_attention.4} parent=1 // loop_header_branch
      %12 = sbr.rel (%p10) target = $region8
    $region5: #{multi_head_attention.4} parent=1 // loop_body
      %s14 = ssub.s32 %s9, 1
      %s15 = ssub.s32 %s9, 2
      %s25 = sadd.s32 1, %s18
      %p26 = scmp.ge.s32.totalorder %s25, 1
      %s27 = scalar_select %p26, 0, %s25
      %s28 = sadd.s32 1, %s17
      %s29 = scalar_select %p26, %s28, %s17
      %p30 = scmp.ge.s32.totalorder %s29, 1
      %s31 = scalar_select %p30, 0, %s29
      %s32 = sadd.s32 1, %s16
      %s33 = scalar_select %p30, %s32, %s16
      %p34 = scmp.ge.s32.totalorder %s33, 2
      %s35 = scalar_select %p34, 0, %s33
      %s36 = ssub.s32 %s16, %s35
      %s37 = ssub.s32 %s17, %s31
      %s38 = sor.u32 %s36, %s37
      %p39 = scmp.eq.s32.totalorder %s38, 0
      %s41 = sadd.s32 %s40, 1
      %s42 = scalar_select %p39, %s40, %s41
      %p45 = pneg %p39
      %p46 = scmp.eq.s32.totalorder %s9, 1
      %p47 = por %p45, %p46
      %p48 = scmp.ne.s32.totalorder %s40, %s43
      %p49 = scmp.eq.s32.totalorder %s9, 0
      %p50 = por %p48, %p49
      %p51 = scmp.ne.s32.totalorder %s40, %s43
      %p52 = scmp.eq.s32.totalorder %s14, 1
      %p53 = por %p51, %p52
      %p54 = scmp.ne.s32.totalorder %s43, %s44
      %p55 = scmp.eq.s32.totalorder %s14, 0
      %p56 = por %p54, %p55
      %p57 = scmp.ne.s32.totalorder %s43, %s44
      %p58 = scmp.eq.s32.totalorder %s15, 1
      %p59 = por %p57, %p58
      %p61 = scmp.ne.s32.totalorder %s44, %s60
      %p62 = scmp.eq.s32.totalorder %s15, 0
      %p63 = por %p61, %p62
      %s64 = ssub.s32 %s16, %s35
      %s65 = ssub.s32 %s18, %s27
      %s66 = sor.u32 %s64, %s65
      %p67 = scmp.eq.s32.totalorder %s66, 0
      %s69 = sadd.s32 %s68, 1
      %s70 = scalar_select %p67, %s68, %s69
      %p73 = pneg %p67
      %p74 = scmp.eq.s32.totalorder %s9, 1
      %p75 = por %p73, %p74
      %p76 = scmp.ne.s32.totalorder %s68, %s71
      %p77 = scmp.eq.s32.totalorder %s9, 0
      %p78 = por %p76, %p77
      %p79 = scmp.ne.s32.totalorder %s68, %s71
      %p80 = scmp.eq.s32.totalorder %s14, 1
      %p81 = por %p79, %p80
      %p82 = scmp.ne.s32.totalorder %s71, %s72
      %p83 = scmp.eq.s32.totalorder %s14, 0
      %p84 = por %p82, %p83
      %p85 = scmp.ne.s32.totalorder %s71, %s72
      %p86 = scmp.eq.s32.totalorder %s15, 1
      %p87 = por %p85, %p86
      %p89 = scmp.ne.s32.totalorder %s72, %s88
      %p90 = scmp.eq.s32.totalorder %s15, 0
      %p91 = por %p89, %p90
      %s92 = ssub.s32 %s16, %s35
      %s93 = ssub.s32 %s18, %s27
      %s94 = sor.u32 %s92, %s93
      %p95 = scmp.eq.s32.totalorder %s94, 0
      %s97 = sadd.s32 %s96, 1
      %s98 = scalar_select %p95, %s96, %s97
      %p101 = pneg %p95
      %p102 = scmp.eq.s32.totalorder %s9, 1
      %p103 = por %p101, %p102
      %p104 = scmp.ne.s32.totalorder %s96, %s99
      %p105 = scmp.eq.s32.totalorder %s9, 0
      %p106 = por %p104, %p105
      %p107 = scmp.ne.s32.totalorder %s96, %s99
      %p108 = scmp.eq.s32.totalorder %s14, 1
      %p109 = por %p107, %p108
      %p110 = scmp.ne.s32.totalorder %s99, %s100
      %p111 = scmp.eq.s32.totalorder %s14, 0
      %p112 = por %p110, %p111
      %p113 = scmp.ne.s32.totalorder %s99, %s100
      %p114 = scmp.eq.s32.totalorder %s15, 1
      %p115 = por %p113, %p114
      %p117 = scmp.ne.s32.totalorder %s100, %s116
      %p118 = scmp.eq.s32.totalorder %s15, 0
      %p119 = por %p117, %p118
      %s120 = ssub.s32 %s16, %s35
      %s121 = ssub.s32 %s17, %s31
      %s122 = sor.u32 %s120, %s121
      %p123 = scmp.eq.s32.totalorder %s122, 0
      %s125 = sadd.s32 %s124, 1
      %s126 = scalar_select %p123, %s124, %s125
      %p129 = pneg %p123
      %p130 = scmp.eq.s32.totalorder %s9, 1
      %p131 = por %p129, %p130
      %p132 = scmp.ne.s32.totalorder %s124, %s127
      %p133 = scmp.eq.s32.totalorder %s9, 0
      %p134 = por %p132, %p133
      %p135 = scmp.ne.s32.totalorder %s124, %s127
      %p136 = scmp.eq.s32.totalorder %s14, 1
      %p137 = por %p135, %p136
      %p138 = scmp.ne.s32.totalorder %s127, %s128
      %p139 = scmp.eq.s32.totalorder %s14, 0
      %p140 = por %p138, %p139
      %p141 = scmp.ne.s32.totalorder %s127, %s128
      %p142 = scmp.eq.s32.totalorder %s15, 1
      %p143 = por %p141, %p142
      %p145 = scmp.ne.s32.totalorder %s128, %s144
      %p146 = scmp.eq.s32.totalorder %s15, 0
      %p147 = por %p145, %p146
      %p148 = scmp.le.s32.totalorder 1, %s9
      %p149 = scmp.lt.s32.totalorder %s9, 3
      %p150 = pnand %p148, %p149
      %p151 = pneg %p150
      // Predicated region
      $region9: #{multi_head_attention.4} parent=5 // pred_check
        _
      $region10: #{multi_head_attention.4} parent=5 // pred_check_branch
        %153 = sbr.rel (%p150) target = $region12
      $region11: #{multi_head_attention.4} parent=5 // pred_region
        %s154 = ssub.s32 %s9, 1
      $region12: #{multi_head_attention.4} parent=5 // pred_fallthru
        _
      %p155 = scmp.lt.s32.totalorder %s9, 2
      // Predicated region
      $region13: #{multi_head_attention.4} parent=5 // pred_check
        %p156 = pneg %p155
      $region14: #{multi_head_attention.4} parent=5 // pred_check_branch
        %158 = sbr.rel (%p156) target = $region16
      $region15: #{multi_head_attention.4} parent=5 // pred_region
        // Predicated region
        $region17: #{multi_head_attention.4} parent=15 // pred_check
          %p159 = pneg %p50
        $region18: #{multi_head_attention.4} parent=15 // pred_check_branch
          %161 = sbr.rel (%p159) target = $region20
        $region19: #{multi_head_attention.4} parent=15 // pred_region
          %s162 = sand.u32 %s40, 1
          %s163 = sand.u32 %s40, 1
          %s164 = smul.addr %s163, 32
          %s165 = scalar_lea.vmem [#allocation5], %s164
          %s166 = smul.u32 8, %s17
          %s167 = smul.addr %s166, 3
          %s168 = smul.addr %s16, 24
          %s169 = sadd.s32 %s167, %s168
          %s170 = smul.addr %s169, 4
          %s171 = scalar_lea.vmem %s0, %s170
          // Predicated region
          $region21: #{multi_head_attention.4} parent=19 // pred_check
            _
          $region22: #{multi_head_attention.4} parent=19 // pred_check_branch
            %173 = sbr.rel (0) target = $region24
          $region23: #{multi_head_attention.4} parent=19 // pred_region
            // Predicated region
            $region25: #{multi_head_attention.4} parent=23 // pred_check
              _
            $region26: #{multi_head_attention.4} parent=23 // pred_check_branch
              %175 = sbr.rel target = $region28
            $region27: #{multi_head_attention.4} parent=23 // pred_region
              // Predicated region
              $region40: #{multi_head_attention.4} parent=27 // pred_check
                _
              $region41: #{multi_head_attention.4} parent=27 // pred_check_branch
                %205 = sbr.rel (0) target = $region43
              $region42: #{multi_head_attention.4} parent=27 // pred_region
                loop: start=0, step=1, limit=1
                $region44: #{multi_head_attention.4} parent=42 // loop_pre_header
                  _
                $region45: #{multi_head_attention.4} parent=42 // loop_header
                  %s207 = sphi 0, %s211
                  %p208 = scmp.ge.s32.totalorder %s207, 1
                  %s212 = sphi %s171, %s171
                  %s213 = sphi %s165, %s165
                $region46: #{multi_head_attention.4} parent=42 // loop_header_branch
                  %210 = sbr.rel (%p208) target = $region50
                $region47: #{multi_head_attention.4} parent=42 // loop_body
                  _
                $region48: #{multi_head_attention.4} parent=42 // loop_footer
                  %s211 = sadd.s32 1, %s207
                $region49: #{multi_head_attention.4} parent=42 // loop_footer_branch
                  %206 = sbr.rel target = $region45
                $region50: #{multi_head_attention.4} parent=42 // loop_exit
                  _
                %s215 = ssub.s32 16, 1
                loop: start=0, step=1, limit=1
                $region51: #{multi_head_attention.4} parent=42 // loop_pre_header
                  _
                $region52: #{multi_head_attention.4} parent=42 // loop_header
                  %s217 = sphi 0, %s221
                  %p218 = scmp.ge.s32.totalorder %s217, 1
                  %s222 = sphi %s171, %s171
                  %s223 = sphi %s165, %s165
                $region53: #{multi_head_attention.4} parent=42 // loop_header_branch
                  %220 = sbr.rel (%p218) target = $region57
                $region54: #{multi_head_attention.4} parent=42 // loop_body
                  %v224 = vld [vmem:[%s222] sm:%s215]
                  %225 = vst [vmem:[%s223] sm:%s215] %v224
                  %v226 = vld [vmem:[%s222 + $0xc] sm:%s215]
                  %227 = vst [vmem:[%s223 + $0x4] sm:%s215] %v226
                  %v228 = vld [vmem:[%s222 + $0x18] sm:%s215]
                  %229 = vst [vmem:[%s223 + $0x8] sm:%s215] %v228
                  %v230 = vld [vmem:[%s222 + $0x24] sm:%s215]
                  %231 = vst [vmem:[%s223 + $0xc] sm:%s215] %v230
                  %v232 = vld [vmem:[%s222 + $0x30] sm:%s215]
                  %233 = vst [vmem:[%s223 + $0x10] sm:%s215] %v232
                  %v234 = vld [vmem:[%s222 + $0x3c] sm:%s215]
                  %235 = vst [vmem:[%s223 + $0x14] sm:%s215] %v234
                  %v236 = vld [vmem:[%s222 + $0x48] sm:%s215]
                  %237 = vst [vmem:[%s223 + $0x18] sm:%s215] %v236
                  %v238 = vld [vmem:[%s222 + $0x54] sm:%s215]
                  %239 = vst [vmem:[%s223 + $0x1c] sm:%s215] %v238
                $region55: #{multi_head_attention.4} parent=42 // loop_footer
                  %s221 = sadd.s32 1, %s217
                $region56: #{multi_head_attention.4} parent=42 // loop_footer_branch
                  %216 = sbr.rel target = $region52
                $region57: #{multi_head_attention.4} parent=42 // loop_exit
                  _
              $region43: #{multi_head_attention.4} parent=27 // pred_fallthru
                _
            $region28: #{multi_head_attention.4} parent=23 // pred_fallthru
              _
            // Predicated region
            $region29: #{multi_head_attention.4} parent=23 // pred_check
              _
            $region30: #{multi_head_attention.4} parent=23 // pred_check_branch
              %177 = sbr.rel (0) target = $region32
            $region31: #{multi_head_attention.4} parent=23 // pred_region
              %s179 = ssub.s32 16, 1
              loop: start=0, step=1, limit=1
              $region33: #{multi_head_attention.4} parent=31 // loop_pre_header
                _
              $region34: #{multi_head_attention.4} parent=31 // loop_header
                %s181 = sphi 0, %s185
                %p182 = scmp.ge.s32.totalorder %s181, 1
                %s186 = sphi %s171, %s171
                %s187 = sphi %s165, %s165
              $region35: #{multi_head_attention.4} parent=31 // loop_header_branch
                %184 = sbr.rel (%p182) target = $region39
              $region36: #{multi_head_attention.4} parent=31 // loop_body
                %v188 = vld [vmem:[%s186] sm:%s179]
                %189 = vst [vmem:[%s187] sm:%s179] %v188
                %v190 = vld [vmem:[%s186 + $0xc] sm:%s179]
                %191 = vst [vmem:[%s187 + $0x4] sm:%s179] %v190
                %v192 = vld [vmem:[%s186 + $0x18] sm:%s179]
                %193 = vst [vmem:[%s187 + $0x8] sm:%s179] %v192
                %v194 = vld [vmem:[%s186 + $0x24] sm:%s179]
                %195 = vst [vmem:[%s187 + $0xc] sm:%s179] %v194
                %v196 = vld [vmem:[%s186 + $0x30] sm:%s179]
                %197 = vst [vmem:[%s187 + $0x10] sm:%s179] %v196
                %v198 = vld [vmem:[%s186 + $0x3c] sm:%s179]
                %199 = vst [vmem:[%s187 + $0x14] sm:%s179] %v198
                %v200 = vld [vmem:[%s186 + $0x48] sm:%s179]
                %201 = vst [vmem:[%s187 + $0x18] sm:%s179] %v200
                %v202 = vld [vmem:[%s186 + $0x54] sm:%s179]
                %203 = vst [vmem:[%s187 + $0x1c] sm:%s179] %v202
              $region37: #{multi_head_attention.4} parent=31 // loop_footer
                %s185 = sadd.s32 1, %s181
              $region38: #{multi_head_attention.4} parent=31 // loop_footer_branch
                %180 = sbr.rel target = $region34
              $region39: #{multi_head_attention.4} parent=31 // loop_exit
                _
            $region32: #{multi_head_attention.4} parent=23 // pred_fallthru
              _
          $region24: #{multi_head_attention.4} parent=19 // pred_fallthru
            _
          %240 = vnop
        $region20: #{multi_head_attention.4} parent=15 // pred_fallthru
          _
        // Predicated region
        $region58: #{multi_head_attention.4} parent=15 // pred_check
          %p241 = pneg %p78
        $region59: #{multi_head_attention.4} parent=15 // pred_check_branch
          %243 = sbr.rel (%p241) target = $region61
        $region60: #{multi_head_attention.4} parent=15 // pred_region
          %s244 = sand.u32 %s68, 1
          %s245 = sand.u32 %s68, 1
          %s246 = smul.addr %s245, 32
          %s247 = scalar_lea.vmem [#allocation6], %s246
          %s248 = smul.u32 8, %s18
          %s249 = smul.addr %s248, 3
          %s250 = sadd.s32 1, %s249
          %s251 = smul.addr %s16, 24
          %s252 = sadd.s32 %s250, %s251
          %s253 = smul.addr %s252, 4
          %s254 = scalar_lea.vmem %s1, %s253
          // Predicated region
          $region62: #{multi_head_attention.4} parent=60 // pred_check
            _
          $region63: #{multi_head_attention.4} parent=60 // pred_check_branch
            %256 = sbr.rel (0) target = $region65
          $region64: #{multi_head_attention.4} parent=60 // pred_region
            // Predicated region
            $region66: #{multi_head_attention.4} parent=64 // pred_check
              _
            $region67: #{multi_head_attention.4} parent=64 // pred_check_branch
              %258 = sbr.rel target = $region69
            $region68: #{multi_head_attention.4} parent=64 // pred_region
              // Predicated region
              $region81: #{multi_head_attention.4} parent=68 // pred_check
                _
              $region82: #{multi_head_attention.4} parent=68 // pred_check_branch
                %288 = sbr.rel (0) target = $region84
              $region83: #{multi_head_attention.4} parent=68 // pred_region
                loop: start=0, step=1, limit=1
                $region85: #{multi_head_attention.4} parent=83 // loop_pre_header
                  _
                $region86: #{multi_head_attention.4} parent=83 // loop_header
                  %s290 = sphi 0, %s294
                  %p291 = scmp.ge.s32.totalorder %s290, 1
                  %s295 = sphi %s254, %s254
                  %s296 = sphi %s247, %s247
                $region87: #{multi_head_attention.4} parent=83 // loop_header_branch
                  %293 = sbr.rel (%p291) target = $region91
                $region88: #{multi_head_attention.4} parent=83 // loop_body
                  _
                $region89: #{multi_head_attention.4} parent=83 // loop_footer
                  %s294 = sadd.s32 1, %s290
                $region90: #{multi_head_attention.4} parent=83 // loop_footer_branch
                  %289 = sbr.rel target = $region86
                $region91: #{multi_head_attention.4} parent=83 // loop_exit
                  _
                %s298 = ssub.s32 16, 1
                loop: start=0, step=1, limit=1
                $region92: #{multi_head_attention.4} parent=83 // loop_pre_header
                  _
                $region93: #{multi_head_attention.4} parent=83 // loop_header
                  %s300 = sphi 0, %s304
                  %p301 = scmp.ge.s32.totalorder %s300, 1
                  %s305 = sphi %s254, %s254
                  %s306 = sphi %s247, %s247
                $region94: #{multi_head_attention.4} parent=83 // loop_header_branch
                  %303 = sbr.rel (%p301) target = $region98
                $region95: #{multi_head_attention.4} parent=83 // loop_body
                  %v307 = vld [vmem:[%s305] sm:%s298]
                  %308 = vst [vmem:[%s306] sm:%s298] %v307
                  %v309 = vld [vmem:[%s305 + $0xc] sm:%s298]
                  %310 = vst [vmem:[%s306 + $0x4] sm:%s298] %v309
                  %v311 = vld [vmem:[%s305 + $0x18] sm:%s298]
                  %312 = vst [vmem:[%s306 + $0x8] sm:%s298] %v311
                  %v313 = vld [vmem:[%s305 + $0x24] sm:%s298]
                  %314 = vst [vmem:[%s306 + $0xc] sm:%s298] %v313
                  %v315 = vld [vmem:[%s305 + $0x30] sm:%s298]
                  %316 = vst [vmem:[%s306 + $0x10] sm:%s298] %v315
                  %v317 = vld [vmem:[%s305 + $0x3c] sm:%s298]
                  %318 = vst [vmem:[%s306 + $0x14] sm:%s298] %v317
                  %v319 = vld [vmem:[%s305 + $0x48] sm:%s298]
                  %320 = vst [vmem:[%s306 + $0x18] sm:%s298] %v319
                  %v321 = vld [vmem:[%s305 + $0x54] sm:%s298]
                  %322 = vst [vmem:[%s306 + $0x1c] sm:%s298] %v321
                $region96: #{multi_head_attention.4} parent=83 // loop_footer
                  %s304 = sadd.s32 1, %s300
                $region97: #{multi_head_attention.4} parent=83 // loop_footer_branch
                  %299 = sbr.rel target = $region93
                $region98: #{multi_head_attention.4} parent=83 // loop_exit
                  _
              $region84: #{multi_head_attention.4} parent=68 // pred_fallthru
                _
            $region69: #{multi_head_attention.4} parent=64 // pred_fallthru
              _
            // Predicated region
            $region70: #{multi_head_attention.4} parent=64 // pred_check
              _
            $region71: #{multi_head_attention.4} parent=64 // pred_check_branch
              %260 = sbr.rel (0) target = $region73
            $region72: #{multi_head_attention.4} parent=64 // pred_region
              %s262 = ssub.s32 16, 1
              loop: start=0, step=1, limit=1
              $region74: #{multi_head_attention.4} parent=72 // loop_pre_header
                _
              $region75: #{multi_head_attention.4} parent=72 // loop_header
                %s264 = sphi 0, %s268
                %p265 = scmp.ge.s32.totalorder %s264, 1
                %s269 = sphi %s254, %s254
                %s270 = sphi %s247, %s247
              $region76: #{multi_head_attention.4} parent=72 // loop_header_branch
                %267 = sbr.rel (%p265) target = $region80
              $region77: #{multi_head_attention.4} parent=72 // loop_body
                %v271 = vld [vmem:[%s269] sm:%s262]
                %272 = vst [vmem:[%s270] sm:%s262] %v271
                %v273 = vld [vmem:[%s269 + $0xc] sm:%s262]
                %274 = vst [vmem:[%s270 + $0x4] sm:%s262] %v273
                %v275 = vld [vmem:[%s269 + $0x18] sm:%s262]
                %276 = vst [vmem:[%s270 + $0x8] sm:%s262] %v275
                %v277 = vld [vmem:[%s269 + $0x24] sm:%s262]
                %278 = vst [vmem:[%s270 + $0xc] sm:%s262] %v277
                %v279 = vld [vmem:[%s269 + $0x30] sm:%s262]
                %280 = vst [vmem:[%s270 + $0x10] sm:%s262] %v279
                %v281 = vld [vmem:[%s269 + $0x3c] sm:%s262]
                %282 = vst [vmem:[%s270 + $0x14] sm:%s262] %v281
                %v283 = vld [vmem:[%s269 + $0x48] sm:%s262]
                %284 = vst [vmem:[%s270 + $0x18] sm:%s262] %v283
                %v285 = vld [vmem:[%s269 + $0x54] sm:%s262]
                %286 = vst [vmem:[%s270 + $0x1c] sm:%s262] %v285
              $region78: #{multi_head_attention.4} parent=72 // loop_footer
                %s268 = sadd.s32 1, %s264
              $region79: #{multi_head_attention.4} parent=72 // loop_footer_branch
                %263 = sbr.rel target = $region75
              $region80: #{multi_head_attention.4} parent=72 // loop_exit
                _
            $region73: #{multi_head_attention.4} parent=64 // pred_fallthru
              _
          $region65: #{multi_head_attention.4} parent=60 // pred_fallthru
            _
          %323 = vnop
        $region61: #{multi_head_attention.4} parent=15 // pred_fallthru
          _
        // Predicated region
        $region99: #{multi_head_attention.4} parent=15 // pred_check
          %p324 = pneg %p106
        $region100: #{multi_head_attention.4} parent=15 // pred_check_branch
          %326 = sbr.rel (%p324) target = $region102
        $region101: #{multi_head_attention.4} parent=15 // pred_region
          %s327 = sand.u32 %s96, 1
          %s328 = sand.u32 %s96, 1
          %s329 = smul.addr %s328, 32
          %s330 = scalar_lea.vmem [#allocation7], %s329
          %s331 = smul.u32 8, %s18
          %s332 = smul.addr %s331, 3
          %s333 = sadd.s32 2, %s332
          %s334 = smul.addr %s16, 24
          %s335 = sadd.s32 %s333, %s334
          %s336 = smul.addr %s335, 4
          %s337 = scalar_lea.vmem %s2, %s336
          // Predicated region
          $region103: #{multi_head_attention.4} parent=101 // pred_check
            _
          $region104: #{multi_head_attention.4} parent=101 // pred_check_branch
            %339 = sbr.rel (0) target = $region106
          $region105: #{multi_head_attention.4} parent=101 // pred_region
            // Predicated region
            $region107: #{multi_head_attention.4} parent=105 // pred_check
              _
            $region108: #{multi_head_attention.4} parent=105 // pred_check_branch
              %341 = sbr.rel target = $region110
            $region109: #{multi_head_attention.4} parent=105 // pred_region
              // Predicated region
              $region122: #{multi_head_attention.4} parent=109 // pred_check
                _
              $region123: #{multi_head_attention.4} parent=109 // pred_check_branch
                %371 = sbr.rel (0) target = $region125
              $region124: #{multi_head_attention.4} parent=109 // pred_region
                loop: start=0, step=1, limit=1
                $region126: #{multi_head_attention.4} parent=124 // loop_pre_header
                  _
                $region127: #{multi_head_attention.4} parent=124 // loop_header
                  %s373 = sphi 0, %s377
                  %p374 = scmp.ge.s32.totalorder %s373, 1
                  %s378 = sphi %s337, %s337
                  %s379 = sphi %s330, %s330
                $region128: #{multi_head_attention.4} parent=124 // loop_header_branch
                  %376 = sbr.rel (%p374) target = $region132
                $region129: #{multi_head_attention.4} parent=124 // loop_body
                  _
                $region130: #{multi_head_attention.4} parent=124 // loop_footer
                  %s377 = sadd.s32 1, %s373
                $region131: #{multi_head_attention.4} parent=124 // loop_footer_branch
                  %372 = sbr.rel target = $region127
                $region132: #{multi_head_attention.4} parent=124 // loop_exit
                  _
                %s381 = ssub.s32 16, 1
                loop: start=0, step=1, limit=1
                $region133: #{multi_head_attention.4} parent=124 // loop_pre_header
                  _
                $region134: #{multi_head_attention.4} parent=124 // loop_header
                  %s383 = sphi 0, %s387
                  %p384 = scmp.ge.s32.totalorder %s383, 1
                  %s388 = sphi %s337, %s337
                  %s389 = sphi %s330, %s330
                $region135: #{multi_head_attention.4} parent=124 // loop_header_branch
                  %386 = sbr.rel (%p384) target = $region139
                $region136: #{multi_head_attention.4} parent=124 // loop_body
                  %v390 = vld [vmem:[%s388] sm:%s381]
                  %391 = vst [vmem:[%s389] sm:%s381] %v390
                  %v392 = vld [vmem:[%s388 + $0xc] sm:%s381]
                  %393 = vst [vmem:[%s389 + $0x4] sm:%s381] %v392
                  %v394 = vld [vmem:[%s388 + $0x18] sm:%s381]
                  %395 = vst [vmem:[%s389 + $0x8] sm:%s381] %v394
                  %v396 = vld [vmem:[%s388 + $0x24] sm:%s381]
                  %397 = vst [vmem:[%s389 + $0xc] sm:%s381] %v396
                  %v398 = vld [vmem:[%s388 + $0x30] sm:%s381]
                  %399 = vst [vmem:[%s389 + $0x10] sm:%s381] %v398
                  %v400 = vld [vmem:[%s388 + $0x3c] sm:%s381]
                  %401 = vst [vmem:[%s389 + $0x14] sm:%s381] %v400
                  %v402 = vld [vmem:[%s388 + $0x48] sm:%s381]
                  %403 = vst [vmem:[%s389 + $0x18] sm:%s381] %v402
                  %v404 = vld [vmem:[%s388 + $0x54] sm:%s381]
                  %405 = vst [vmem:[%s389 + $0x1c] sm:%s381] %v404
                $region137: #{multi_head_attention.4} parent=124 // loop_footer
                  %s387 = sadd.s32 1, %s383
                $region138: #{multi_head_attention.4} parent=124 // loop_footer_branch
                  %382 = sbr.rel target = $region134
                $region139: #{multi_head_attention.4} parent=124 // loop_exit
                  _
              $region125: #{multi_head_attention.4} parent=109 // pred_fallthru
                _
            $region110: #{multi_head_attention.4} parent=105 // pred_fallthru
              _
            // Predicated region
            $region111: #{multi_head_attention.4} parent=105 // pred_check
              _
            $region112: #{multi_head_attention.4} parent=105 // pred_check_branch
              %343 = sbr.rel (0) target = $region114
            $region113: #{multi_head_attention.4} parent=105 // pred_region
              %s345 = ssub.s32 16, 1
              loop: start=0, step=1, limit=1
              $region115: #{multi_head_attention.4} parent=113 // loop_pre_header
                _
              $region116: #{multi_head_attention.4} parent=113 // loop_header
                %s347 = sphi 0, %s351
                %p348 = scmp.ge.s32.totalorder %s347, 1
                %s352 = sphi %s337, %s337
                %s353 = sphi %s330, %s330
              $region117: #{multi_head_attention.4} parent=113 // loop_header_branch
                %350 = sbr.rel (%p348) target = $region121
              $region118: #{multi_head_attention.4} parent=113 // loop_body
                %v354 = vld [vmem:[%s352] sm:%s345]
                %355 = vst [vmem:[%s353] sm:%s345] %v354
                %v356 = vld [vmem:[%s352 + $0xc] sm:%s345]
                %357 = vst [vmem:[%s353 + $0x4] sm:%s345] %v356
                %v358 = vld [vmem:[%s352 + $0x18] sm:%s345]
                %359 = vst [vmem:[%s353 + $0x8] sm:%s345] %v358
                %v360 = vld [vmem:[%s352 + $0x24] sm:%s345]
                %361 = vst [vmem:[%s353 + $0xc] sm:%s345] %v360
                %v362 = vld [vmem:[%s352 + $0x30] sm:%s345]
                %363 = vst [vmem:[%s353 + $0x10] sm:%s345] %v362
                %v364 = vld [vmem:[%s352 + $0x3c] sm:%s345]
                %365 = vst [vmem:[%s353 + $0x14] sm:%s345] %v364
                %v366 = vld [vmem:[%s352 + $0x48] sm:%s345]
                %367 = vst [vmem:[%s353 + $0x18] sm:%s345] %v366
                %v368 = vld [vmem:[%s352 + $0x54] sm:%s345]
                %369 = vst [vmem:[%s353 + $0x1c] sm:%s345] %v368
              $region119: #{multi_head_attention.4} parent=113 // loop_footer
                %s351 = sadd.s32 1, %s347
              $region120: #{multi_head_attention.4} parent=113 // loop_footer_branch
                %346 = sbr.rel target = $region116
              $region121: #{multi_head_attention.4} parent=113 // loop_exit
                _
            $region114: #{multi_head_attention.4} parent=105 // pred_fallthru
              _
          $region106: #{multi_head_attention.4} parent=101 // pred_fallthru
            _
          %406 = vnop
        $region102: #{multi_head_attention.4} parent=15 // pred_fallthru
          _
      $region16: #{multi_head_attention.4} parent=5 // pred_fallthru
        _
      %p407 = scmp.le.s32.totalorder 1, %s9
      %p408 = scmp.lt.s32.totalorder %s9, 3
      %p409 = pnand %p407, %p408
      %p410 = pneg %p409
      // Predicated region
      $region140: #{multi_head_attention.4} parent=5 // pred_check
        _
      $region141: #{multi_head_attention.4} parent=5 // pred_check_branch
        %412 = sbr.rel (%p409) target = $region143
      $region142: #{multi_head_attention.4} parent=5 // pred_region
        %s413 = ssub.s32 %s9, 1
        %s414 = sand.u32 %s43, 1
        %s415 = sand.u32 %s43, 1
        %s416 = smul.addr %s415, 32
        %s417 = scalar_lea.vmem [#allocation5], %s416
        // Predicated region
        $region144: #{multi_head_attention.4} parent=142 // pred_check
          %p418 = pneg %p56
        $region145: #{multi_head_attention.4} parent=142 // pred_check_branch
          %420 = sbr.rel (%p418) target = $region147
        $region146: #{multi_head_attention.4} parent=142 // pred_region
          _
        $region147: #{multi_head_attention.4} parent=142 // pred_fallthru
          _
        %s421 = sand.u32 %s71, 1
        %s422 = sand.u32 %s71, 1
        %s423 = smul.addr %s422, 32
        %s424 = scalar_lea.vmem [#allocation6], %s423
        // Predicated region
        $region148: #{multi_head_attention.4} parent=142 // pred_check
          %p425 = pneg %p84
        $region149: #{multi_head_attention.4} parent=142 // pred_check_branch
          %427 = sbr.rel (%p425) target = $region151
        $region150: #{multi_head_attention.4} parent=142 // pred_region
          _
        $region151: #{multi_head_attention.4} parent=142 // pred_fallthru
          _
        %s428 = sand.u32 %s99, 1
        %s429 = sand.u32 %s99, 1
        %s430 = smul.addr %s429, 32
        %s431 = scalar_lea.vmem [#allocation7], %s430
        // Predicated region
        $region152: #{multi_head_attention.4} parent=142 // pred_check
          %p432 = pneg %p112
        $region153: #{multi_head_attention.4} parent=142 // pred_check_branch
          %434 = sbr.rel (%p432) target = $region155
        $region154: #{multi_head_attention.4} parent=142 // pred_region
          _
        $region155: #{multi_head_attention.4} parent=142 // pred_fallthru
          _
        %s435 = sand.u32 %s43, 1
        %s436 = sand.u32 %s43, 1
        %s437 = smul.addr %s436, 32
        %s438 = scalar_lea.vmem [#allocation5], %s437
        %p439 = pneg %p56
        %p440 = pneg %p53
        %s441 = sand.u32 %s71, 1
        %s442 = sand.u32 %s71, 1
        %s443 = smul.addr %s442, 32
        %s444 = scalar_lea.vmem [#allocation6], %s443
        %p445 = pneg %p84
        %p446 = pneg %p81
        %s447 = sand.u32 %s99, 1
        %s448 = sand.u32 %s99, 1
        %s449 = smul.addr %s448, 32
        %s450 = scalar_lea.vmem [#allocation7], %s449
        %p451 = pneg %p112
        %p452 = pneg %p109
        %p453 = pneg %p140
        %p454 = pneg %p137
        %p455 = scmp.lt.s32.totalorder %s19, 1
        %s456 = scalar_select %p455, %s19, 1
        %p457 = scmp.lt.s32.totalorder %s20, 0
        %s458 = scalar_select %p457, %s20, 0
        %s459 = sadd.s32 %s458, %s456
        %s460 = smul.addr %s459, 8
        %s461 = scalar_lea.vmem %s3, %s460
        %s462 = smul.u32 8, %s20
        %s463 = smul.u32 8, %s21
        %s464 = smul.u32 8, %s21
        %p465 = scmp.lt.s32.totalorder %s19, 1
        %s466 = scalar_select %p465, %s19, 1
        %p467 = scmp.lt.s32.totalorder %s20, 0
        %s468 = scalar_select %p467, %s20, 0
        %s469 = sadd.s32 %s468, %s466
        %s470 = smul.addr %s469, 8
        %s471 = scalar_lea.vmem %s3, %s470
        %p473 = scmp.eq.s32.totalorder %s21, 0
        // Predicated region
        $region156: #{multi_head_attention.4} parent=142 // pred_check
          %p474 = pneg %p473
        $region157: #{multi_head_attention.4} parent=142 // pred_check_branch
          %476 = sbr.rel (%p474) target = $region159
        $region158: #{multi_head_attention.4} parent=142 // pred_region
          %vm477 = vcmask 7168
          %478 = vst.msk [vmem:[#allocation2] sm:$0xff] %vm477, -inf
          %479 = vst.msk [vmem:[#allocation2 + $0x8] sm:$0xff] %vm477, -inf
          %480 = vst.msk [vmem:[#allocation2 + $0x10] sm:$0xff] %vm477, -inf
          %481 = vst.msk [vmem:[#allocation2 + $0x18] sm:$0xff] %vm477, -inf
          %482 = vst.msk [vmem:[#allocation3] sm:$0xff] %vm477, 0.0
          %483 = vst.msk [vmem:[#allocation3 + $0x8] sm:$0xff] %vm477, 0.0
          %484 = vst.msk [vmem:[#allocation3 + $0x10] sm:$0xff] %vm477, 0.0
          %485 = vst.msk [vmem:[#allocation3 + $0x18] sm:$0xff] %vm477, 0.0
          %vm486 = vcmask 64512
          %487 = vst.msk [vmem:[#allocation4] sm:$0xff] %vm486, 0.0
          %488 = vst.msk [vmem:[#allocation4 + $0x8] sm:$0xff] %vm486, 0.0
          %489 = vst.msk [vmem:[#allocation4 + $0x10] sm:$0xff] %vm486, 0.0
          %490 = vst.msk [vmem:[#allocation4 + $0x18] sm:$0xff] %vm486, 0.0
        $region159: #{multi_head_attention.4} parent=142 // pred_fallthru
          _
        %v491 = vld [vmem:[%s417] sm:$0x1]
        %v492 = vld [vmem:[%s417 + $0x4] sm:$0x1]
        %v493 = vld [vmem:[%s417 + $0x8] sm:$0x1]
        %v494 = vld [vmem:[%s417 + $0xc] sm:$0x1]
        %v495 = vld [vmem:[%s417 + $0x10] sm:$0x1]
        %v496 = vld [vmem:[%s417 + $0x14] sm:$0x1]
        %v497 = vld [vmem:[%s417 + $0x18] sm:$0x1]
        %v498 = vld [vmem:[%s417 + $0x1c] sm:$0x1]
        %v499 = vpack.c.bf16 %v491, %v491
        %v500 = vpack.c.bf16 %v492, %v492
        %v501 = vpack.c.bf16 %v493, %v493
        %v502 = vpack.c.bf16 %v494, %v494
        %v503 = vpack.c.bf16 %v495, %v495
        %v504 = vpack.c.bf16 %v496, %v496
        %v505 = vpack.c.bf16 %v497, %v497
        %v506 = vpack.c.bf16 %v498, %v498
        %v507 = vld [vmem:[%s424] sm:$0x1]
        %v508 = vld [vmem:[%s424 + $0x4] sm:$0x1]
        %v509 = vld [vmem:[%s424 + $0x8] sm:$0x1]
        %v510 = vld [vmem:[%s424 + $0xc] sm:$0x1]
        %v511 = vld [vmem:[%s424 + $0x10] sm:$0x1]
        %v512 = vld [vmem:[%s424 + $0x14] sm:$0x1]
        %v513 = vld [vmem:[%s424 + $0x18] sm:$0x1]
        %v514 = vld [vmem:[%s424 + $0x1c] sm:$0x1]
        %v515 = vpack.c.bf16 %v507, %v507
        %v516 = vpack.c.bf16 %v508, %v508
        %v517 = vpack.c.bf16 %v509, %v509
        %v518 = vpack.c.bf16 %v510, %v510
        %v519 = vpack.c.bf16 %v511, %v511
        %v520 = vpack.c.bf16 %v512, %v512
        %v521 = vpack.c.bf16 %v513, %v513
        %v522 = vpack.c.bf16 %v514, %v514
        %v531 = vunpack.c.l.b16 %v499
        %v532 = vunpack.c.l.b16 %v500
        %v533 = vunpack.c.l.b16 %v501
        %v534 = vunpack.c.l.b16 %v502
        %v535 = vunpack.c.l.b16 %v503
        %v536 = vunpack.c.l.b16 %v504
        %v537 = vunpack.c.l.b16 %v505
        %v538 = vunpack.c.l.b16 %v506
        %v539 = vrot.slane %v532, 7
        %vm540 = vcmask 1041409
        %v541 = vsel %vm540, %v539, %v531
        %v542 = vrot.slane %v533, 6
        %vm543 = vcmask 1042434
        %v544 = vsel %vm543, %v542, %v541
        %v545 = vrot.slane %v534, 5
        %vm546 = vcmask 1043459
        %v547 = vsel %vm546, %v545, %v544
        %v548 = vrot.slane %v535, 4
        %vm549 = vcmask 1044484
        %v550 = vsel %vm549, %v548, %v547
        %v551 = vrot.slane %v536, 3
        %vm552 = vcmask 1045509
        %v553 = vsel %vm552, %v551, %v550
        %v554 = vrot.slane %v537, 2
        %vm555 = vcmask 1046534
        %v556 = vsel %vm555, %v554, %v553
        %v557 = vrot.slane %v538, 1
        %vm558 = vcmask 1047559
        %v559 = vsel %vm558, %v557, %v556
        %v560 = vpack.c.b16 %v559, %v559
        %v569 = vunpack.c.l.b16 %v515
        %v570 = vunpack.c.l.b16 %v516
        %v571 = vunpack.c.l.b16 %v517
        %v572 = vunpack.c.l.b16 %v518
        %v573 = vunpack.c.l.b16 %v519
        %v574 = vunpack.c.l.b16 %v520
        %v575 = vunpack.c.l.b16 %v521
        %v576 = vunpack.c.l.b16 %v522
        %v577 = vrot.slane %v570, 7
        %v578 = vsel %vm540, %v577, %v569
        %v579 = vrot.slane %v571, 6
        %v580 = vsel %vm543, %v579, %v578
        %v581 = vrot.slane %v572, 5
        %v582 = vsel %vm546, %v581, %v580
        %v583 = vrot.slane %v573, 4
        %v584 = vsel %vm549, %v583, %v582
        %v585 = vrot.slane %v574, 3
        %v586 = vsel %vm552, %v585, %v584
        %v587 = vrot.slane %v575, 2
        %v588 = vsel %vm555, %v587, %v586
        %v589 = vrot.slane %v576, 1
        %v590 = vsel %vm558, %v589, %v588
        %v591 = vpack.c.b16 %v590, %v590
        %vm592 = vcmask 64512
        %v594 = vsel %vm592, %v560, 0
        %v597 = vsel %vm592, %v591, 0
        %599 = vmatprep.subr.bf16.mxu0 0
        %600 = vmatpush1.bf16.xpose.msra.mxu0 0
        %601 = vmatprep.subr.bf16.mxu0 0
        %602 = vmatpush1.bf16.xpose.msra.mxu0 0
        %603 = vmatprep.subr.bf16.mxu0 0
        %604 = vmatpush1.bf16.xpose.msra.mxu0 0
        %605 = vmatprep.subr.bf16.mxu0 0
        %606 = vmatpush1.bf16.xpose.msra.mxu0 0
        %607 = vmatprep.subr.bf16.mxu0 0
        %608 = vmatpush1.bf16.xpose.msra.mxu0 0
        %609 = vmatprep.subr.bf16.mxu0 0
        %610 = vmatpush1.bf16.xpose.msra.mxu0 0
        %611 = vmatprep.subr.bf16.mxu0 0
        %612 = vmatpush1.bf16.xpose.msra.mxu0 0
        %613 = vmatprep.subr.bf16.mxu0 0
        %614 = vmatpush1.bf16.xpose.msra.mxu0 %v597
        %615 = vmatprep.subr.bf16.mxu0 0
        %616 = vmatpush2.bf16.xpose.msra.mxu0 0
        %617 = vmatprep.subr.bf16.mxu0 0
        %618 = vmatpush2.bf16.xpose.msra.mxu0 0
        %619 = vmatprep.subr.bf16.mxu0 0
        %620 = vmatpush2.bf16.xpose.msra.mxu0 0
        %621 = vmatprep.subr.bf16.mxu0 0
        %622 = vmatpush2.bf16.xpose.msra.mxu0 0
        %623 = vmatprep.subr.bf16.mxu0 0
        %624 = vmatpush2.bf16.xpose.msra.mxu0 0
        %625 = vmatprep.subr.bf16.mxu0 0
        %626 = vmatpush2.bf16.xpose.msra.mxu0 0
        %627 = vmatprep.subr.bf16.mxu0 0
        %628 = vmatpush2.bf16.xpose.msra.mxu0 0
        %629 = vmatprep.subr.bf16.mxu0 0
        %630 = vmatpush2.bf16.xpose.msra.mxu0 0
        %631 = vmatprep.mubr.bf16.mxu0 0
        %632 = vmatmul.mubr.bf16.gmra.mxu0 %v594
        %v633 = vpop.f32.mrf.mxu0
        %v634 = vadd.f32 0.0, %v633
        %v635 = vpop.f32.mrf.mxu0
        %v636 = vpop.f32.mrf.mxu0
        %v637 = vpop.f32.mrf.mxu0
        %638 = vdwg.mxu0
        %v639 = vld [vmem:[#allocation2] sm:$0xff]
        %v640 = vsel %vm592, %v634, -inf
        %641 = vmax.xlane.f32.xlu0 %v640
        %v642 = vpop.xlane.xlu0 %641
        %v643 = vmax.f32 %v639, %v642
        %v644 = vsub.f32 %v639, %v643
        %v645 = vmul.f32 %v644, 1.442695
        %v646 = vpow.pop %v645
        %648 = vset.pattern.permute.xlu0 0
        %649 = vperm.xlu0 %648, %v643
        %v650 = vpop.permute.xlu0 %649
        %v652 = vsub.f32 %v634, %v650
        %v653 = vmul.f32 %v652, 1.442695
        %v654 = vpow.pop %v653
        %v655 = vld [vmem:[#allocation3] sm:$0xff]
        %v656 = vmul.f32 %v646, %v655
        %v657 = vsel %vm592, %v654, 0.0
        %658 = vadd.xlane.f32.xlu0 %v657
        %v659 = vpop.xlane.xlu0 %658
        %v660 = vadd.f32 %v656, %v659
        %vm661 = vcmask 7168
        %662 = vst.msk [vmem:[#allocation3] sm:$0xff] %vm661, %v660
        %v663 = vpack.c.bf16 %v654, %v654
        %v664 = vld [vmem:[%s431] sm:$0x1]
        %v665 = vld [vmem:[%s431 + $0x4] sm:$0x1]
        %v666 = vld [vmem:[%s431 + $0x8] sm:$0x1]
        %v667 = vld [vmem:[%s431 + $0xc] sm:$0x1]
        %v668 = vld [vmem:[%s431 + $0x10] sm:$0x1]
        %v669 = vld [vmem:[%s431 + $0x14] sm:$0x1]
        %v670 = vld [vmem:[%s431 + $0x18] sm:$0x1]
        %v671 = vld [vmem:[%s431 + $0x1c] sm:$0x1]
        %v672 = vpack.c.bf16 %v664, %v664
        %v673 = vpack.c.bf16 %v665, %v665
        %v674 = vpack.c.bf16 %v666, %v666
        %v675 = vpack.c.bf16 %v667, %v667
        %v676 = vpack.c.bf16 %v668, %v668
        %v677 = vpack.c.bf16 %v669, %v669
        %v678 = vpack.c.bf16 %v670, %v670
        %v679 = vpack.c.bf16 %v671, %v671
        %v688 = vunpack.c.l.b16 %v672
        %v689 = vunpack.c.l.b16 %v673
        %v690 = vunpack.c.l.b16 %v674
        %v691 = vunpack.c.l.b16 %v675
        %v692 = vunpack.c.l.b16 %v676
        %v693 = vunpack.c.l.b16 %v677
        %v694 = vunpack.c.l.b16 %v678
        %v695 = vunpack.c.l.b16 %v679
        %v696 = vrot.slane %v689, 7
        %v697 = vsel %vm540, %v696, %v688
        %v698 = vrot.slane %v690, 6
        %v699 = vsel %vm543, %v698, %v697
        %v700 = vrot.slane %v691, 5
        %v701 = vsel %vm546, %v700, %v699
        %v702 = vrot.slane %v692, 4
        %v703 = vsel %vm549, %v702, %v701
        %v704 = vrot.slane %v693, 3
        %v705 = vsel %vm552, %v704, %v703
        %v706 = vrot.slane %v694, 2
        %v707 = vsel %vm555, %v706, %v705
        %v708 = vrot.slane %v695, 1
        %v709 = vsel %vm558, %v708, %v707
        %v710 = vpack.c.b16 %v709, %v709
        %v712 = vsel %vm592, %v663, 0
        %vm714 = vcmask 1043456
        %v716 = vsel %vm714, %v710, 0
        %718 = vmatprep.subr.bf16.mxu0 0
        %719 = vmatpush1.bf16.msra.mxu0 0
        %720 = vmatprep.subr.bf16.mxu0 0
        %721 = vmatpush1.bf16.msra.mxu0 0
        %722 = vmatprep.subr.bf16.mxu0 0
        %723 = vmatpush1.bf16.msra.mxu0 0
        %724 = vmatprep.subr.bf16.mxu0 0
        %725 = vmatpush1.bf16.msra.mxu0 0
        %726 = vmatprep.subr.bf16.mxu0 0
        %727 = vmatpush1.bf16.msra.mxu0 0
        %728 = vmatprep.subr.bf16.mxu0 0
        %729 = vmatpush1.bf16.msra.mxu0 0
        %730 = vmatprep.subr.bf16.mxu0 0
        %731 = vmatpush1.bf16.msra.mxu0 0
        %732 = vmatprep.subr.bf16.mxu0 0
        %733 = vmatpush1.bf16.msra.mxu0 %v716
        %734 = vmatprep.subr.bf16.mxu0 0
        %735 = vmatpush2.bf16.msra.mxu0 0
        %736 = vmatprep.subr.bf16.mxu0 0
        %737 = vmatpush2.bf16.msra.mxu0 0
        %738 = vmatprep.subr.bf16.mxu0 0
        %739 = vmatpush2.bf16.msra.mxu0 0
        %740 = vmatprep.subr.bf16.mxu0 0
        %741 = vmatpush2.bf16.msra.mxu0 0
        %742 = vmatprep.subr.bf16.mxu0 0
        %743 = vmatpush2.bf16.msra.mxu0 0
        %744 = vmatprep.subr.bf16.mxu0 0
        %745 = vmatpush2.bf16.msra.mxu0 0
        %746 = vmatprep.subr.bf16.mxu0 0
        %747 = vmatpush2.bf16.msra.mxu0 0
        %748 = vmatprep.subr.bf16.mxu0 0
        %749 = vmatpush2.bf16.msra.mxu0 0
        %750 = vmatprep.mubr.bf16.mxu0 0
        %751 = vmatmul.mubr.bf16.gmra.mxu0 %v712
        %v752 = vpop.f32.mrf.mxu0
        %v753 = vadd.f32 0.0, %v752
        %v754 = vpop.f32.mrf.mxu0
        %v755 = vpop.f32.mrf.mxu0
        %v756 = vpop.f32.mrf.mxu0
        %757 = vdwg.mxu0
        %v758 = vld [vmem:[#allocation4] sm:$0xff]
        %760 = vset.pattern.permute.xlu0 0
        %761 = vperm.xlu0 %760, %v646
        %v762 = vpop.permute.xlu0 %761
        %v764 = vmul.f32 %v762, %v758
        %v765 = vadd.f32 %v764, %v753
        %766 = vst.msk [vmem:[#allocation4] sm:$0xff] %vm592, %v765
        %767 = vst.msk [vmem:[#allocation2] sm:$0xff] %vm661, %v643
        %v768 = vld [vmem:[%s417 + $0x1] sm:$0x1]
        %v769 = vld [vmem:[%s417 + $0x5] sm:$0x1]
        %v770 = vld [vmem:[%s417 + $0x9] sm:$0x1]
        %v771 = vld [vmem:[%s417 + $0xd] sm:$0x1]
        %v772 = vld [vmem:[%s417 + $0x11] sm:$0x1]
        %v773 = vld [vmem:[%s417 + $0x15] sm:$0x1]
        %v774 = vld [vmem:[%s417 + $0x19] sm:$0x1]
        %v775 = vld [vmem:[%s417 + $0x1d] sm:$0x1]
        %v776 = vpack.c.bf16 %v768, %v768
        %v777 = vpack.c.bf16 %v769, %v769
        %v778 = vpack.c.bf16 %v770, %v770
        %v779 = vpack.c.bf16 %v771, %v771
        %v780 = vpack.c.bf16 %v772, %v772
        %v781 = vpack.c.bf16 %v773, %v773
        %v782 = vpack.c.bf16 %v774, %v774
        %v783 = vpack.c.bf16 %v775, %v775
        %v784 = vld [vmem:[%s424 + $0x1] sm:$0x1]
        %v785 = vld [vmem:[%s424 + $0x5] sm:$0x1]
        %v786 = vld [vmem:[%s424 + $0x9] sm:$0x1]
        %v787 = vld [vmem:[%s424 + $0xd] sm:$0x1]
        %v788 = vld [vmem:[%s424 + $0x11] sm:$0x1]
        %v789 = vld [vmem:[%s424 + $0x15] sm:$0x1]
        %v790 = vld [vmem:[%s424 + $0x19] sm:$0x1]
        %v791 = vld [vmem:[%s424 + $0x1d] sm:$0x1]
        %v792 = vpack.c.bf16 %v784, %v784
        %v793 = vpack.c.bf16 %v785, %v785
        %v794 = vpack.c.bf16 %v786, %v786
        %v795 = vpack.c.bf16 %v787, %v787
        %v796 = vpack.c.bf16 %v788, %v788
        %v797 = vpack.c.bf16 %v789, %v789
        %v798 = vpack.c.bf16 %v790, %v790
        %v799 = vpack.c.bf16 %v791, %v791
        %v808 = vunpack.c.l.b16 %v776
        %v809 = vunpack.c.l.b16 %v777
        %v810 = vunpack.c.l.b16 %v778
        %v811 = vunpack.c.l.b16 %v779
        %v812 = vunpack.c.l.b16 %v780
        %v813 = vunpack.c.l.b16 %v781
        %v814 = vunpack.c.l.b16 %v782
        %v815 = vunpack.c.l.b16 %v783
        %v816 = vrot.slane %v809, 7
        %v817 = vsel %vm540, %v816, %v808
        %v818 = vrot.slane %v810, 6
        %v819 = vsel %vm543, %v818, %v817
        %v820 = vrot.slane %v811, 5
        %v821 = vsel %vm546, %v820, %v819
        %v822 = vrot.slane %v812, 4
        %v823 = vsel %vm549, %v822, %v821
        %v824 = vrot.slane %v813, 3
        %v825 = vsel %vm552, %v824, %v823
        %v826 = vrot.slane %v814, 2
        %v827 = vsel %vm555, %v826, %v825
        %v828 = vrot.slane %v815, 1
        %v829 = vsel %vm558, %v828, %v827
        %v830 = vpack.c.b16 %v829, %v829
        %v839 = vunpack.c.l.b16 %v792
        %v840 = vunpack.c.l.b16 %v793
        %v841 = vunpack.c.l.b16 %v794
        %v842 = vunpack.c.l.b16 %v795
        %v843 = vunpack.c.l.b16 %v796
        %v844 = vunpack.c.l.b16 %v797
        %v845 = vunpack.c.l.b16 %v798
        %v846 = vunpack.c.l.b16 %v799
        %v847 = vrot.slane %v840, 7
        %v848 = vsel %vm540, %v847, %v839
        %v849 = vrot.slane %v841, 6
        %v850 = vsel %vm543, %v849, %v848
        %v851 = vrot.slane %v842, 5
        %v852 = vsel %vm546, %v851, %v850
        %v853 = vrot.slane %v843, 4
        %v854 = vsel %vm549, %v853, %v852
        %v855 = vrot.slane %v844, 3
        %v856 = vsel %vm552, %v855, %v854
        %v857 = vrot.slane %v845, 2
        %v858 = vsel %vm555, %v857, %v856
        %v859 = vrot.slane %v846, 1
        %v860 = vsel %vm558, %v859, %v858
        %v861 = vpack.c.b16 %v860, %v860
        %v863 = vsel %vm592, %v830, 0
        %v866 = vsel %vm592, %v861, 0
        %868 = vmatprep.subr.bf16.mxu0 0
        %869 = vmatpush1.bf16.xpose.msra.mxu0 0
        %870 = vmatprep.subr.bf16.mxu0 0
        %871 = vmatpush1.bf16.xpose.msra.mxu0 0
        %872 = vmatprep.subr.bf16.mxu0 0
        %873 = vmatpush1.bf16.xpose.msra.mxu0 0
        %874 = vmatprep.subr.bf16.mxu0 0
        %875 = vmatpush1.bf16.xpose.msra.mxu0 0
        %876 = vmatprep.subr.bf16.mxu0 0
        %877 = vmatpush1.bf16.xpose.msra.mxu0 0
        %878 = vmatprep.subr.bf16.mxu0 0
        %879 = vmatpush1.bf16.xpose.msra.mxu0 0
        %880 = vmatprep.subr.bf16.mxu0 0
        %881 = vmatpush1.bf16.xpose.msra.mxu0 0
        %882 = vmatprep.subr.bf16.mxu0 0
        %883 = vmatpush1.bf16.xpose.msra.mxu0 %v866
        %884 = vmatprep.subr.bf16.mxu0 0
        %885 = vmatpush2.bf16.xpose.msra.mxu0 0
        %886 = vmatprep.subr.bf16.mxu0 0
        %887 = vmatpush2.bf16.xpose.msra.mxu0 0
        %888 = vmatprep.subr.bf16.mxu0 0
        %889 = vmatpush2.bf16.xpose.msra.mxu0 0
        %890 = vmatprep.subr.bf16.mxu0 0
        %891 = vmatpush2.bf16.xpose.msra.mxu0 0
        %892 = vmatprep.subr.bf16.mxu0 0
        %893 = vmatpush2.bf16.xpose.msra.mxu0 0
        %894 = vmatprep.subr.bf16.mxu0 0
        %895 = vmatpush2.bf16.xpose.msra.mxu0 0
        %896 = vmatprep.subr.bf16.mxu0 0
        %897 = vmatpush2.bf16.xpose.msra.mxu0 0
        %898 = vmatprep.subr.bf16.mxu0 0
        %899 = vmatpush2.bf16.xpose.msra.mxu0 0
        %900 = vmatprep.mubr.bf16.mxu0 0
        %901 = vmatmul.mubr.bf16.gmra.mxu0 %v863
        %v902 = vpop.f32.mrf.mxu0
        %v903 = vadd.f32 0.0, %v902
        %v904 = vpop.f32.mrf.mxu0
        %v905 = vpop.f32.mrf.mxu0
        %v906 = vpop.f32.mrf.mxu0
        %907 = vdwg.mxu0
        %s908 = scalar_lea.vmem [#allocation2], 8
        %v909 = vld [vmem:[%s908] sm:$0xff]
        %v910 = vsel %vm592, %v903, -inf
        %911 = vmax.xlane.f32.xlu0 %v910
        %v912 = vpop.xlane.xlu0 %911
        %v913 = vmax.f32 %v909, %v912
        %v914 = vsub.f32 %v909, %v913
        %v915 = vmul.f32 %v914, 1.442695
        %v916 = vpow.pop %v915
        %918 = vset.pattern.permute.xlu0 0
        %919 = vperm.xlu0 %918, %v913
        %v920 = vpop.permute.xlu0 %919
        %v922 = vsub.f32 %v903, %v920
        %v923 = vmul.f32 %v922, 1.442695
        %v924 = vpow.pop %v923
        %s925 = scalar_lea.vmem [#allocation3], 8
        %v926 = vld [vmem:[%s925] sm:$0xff]
        %v927 = vmul.f32 %v916, %v926
        %v928 = vsel %vm592, %v924, 0.0
        %929 = vadd.xlane.f32.xlu0 %v928
        %v930 = vpop.xlane.xlu0 %929
        %v931 = vadd.f32 %v927, %v930
        %932 = vst.msk [vmem:[%s925] sm:$0xff] %vm661, %v931
        %v933 = vpack.c.bf16 %v924, %v924
        %v934 = vld [vmem:[%s431 + $0x1] sm:$0x1]
        %v935 = vld [vmem:[%s431 + $0x5] sm:$0x1]
        %v936 = vld [vmem:[%s431 + $0x9] sm:$0x1]
        %v937 = vld [vmem:[%s431 + $0xd] sm:$0x1]
        %v938 = vld [vmem:[%s431 + $0x11] sm:$0x1]
        %v939 = vld [vmem:[%s431 + $0x15] sm:$0x1]
        %v940 = vld [vmem:[%s431 + $0x19] sm:$0x1]
        %v941 = vld [vmem:[%s431 + $0x1d] sm:$0x1]
        %v942 = vpack.c.bf16 %v934, %v934
        %v943 = vpack.c.bf16 %v935, %v935
        %v944 = vpack.c.bf16 %v936, %v936
        %v945 = vpack.c.bf16 %v937, %v937
        %v946 = vpack.c.bf16 %v938, %v938
        %v947 = vpack.c.bf16 %v939, %v939
        %v948 = vpack.c.bf16 %v940, %v940
        %v949 = vpack.c.bf16 %v941, %v941
        %v958 = vunpack.c.l.b16 %v942
        %v959 = vunpack.c.l.b16 %v943
        %v960 = vunpack.c.l.b16 %v944
        %v961 = vunpack.c.l.b16 %v945
        %v962 = vunpack.c.l.b16 %v946
        %v963 = vunpack.c.l.b16 %v947
        %v964 = vunpack.c.l.b16 %v948
        %v965 = vunpack.c.l.b16 %v949
        %v966 = vrot.slane %v959, 7
        %v967 = vsel %vm540, %v966, %v958
        %v968 = vrot.slane %v960, 6
        %v969 = vsel %vm543, %v968, %v967
        %v970 = vrot.slane %v961, 5
        %v971 = vsel %vm546, %v970, %v969
        %v972 = vrot.slane %v962, 4
        %v973 = vsel %vm549, %v972, %v971
        %v974 = vrot.slane %v963, 3
        %v975 = vsel %vm552, %v974, %v973
        %v976 = vrot.slane %v964, 2
        %v977 = vsel %vm555, %v976, %v975
        %v978 = vrot.slane %v965, 1
        %v979 = vsel %vm558, %v978, %v977
        %v980 = vpack.c.b16 %v979, %v979
        %v982 = vsel %vm592, %v933, 0
        %v985 = vsel %vm714, %v980, 0
        %987 = vmatprep.subr.bf16.mxu0 0
        %988 = vmatpush1.bf16.msra.mxu0 0
        %989 = vmatprep.subr.bf16.mxu0 0
        %990 = vmatpush1.bf16.msra.mxu0 0
        %991 = vmatprep.subr.bf16.mxu0 0
        %992 = vmatpush1.bf16.msra.mxu0 0
        %993 = vmatprep.subr.bf16.mxu0 0
        %994 = vmatpush1.bf16.msra.mxu0 0
        %995 = vmatprep.subr.bf16.mxu0 0
        %996 = vmatpush1.bf16.msra.mxu0 0
        %997 = vmatprep.subr.bf16.mxu0 0
        %998 = vmatpush1.bf16.msra.mxu0 0
        %999 = vmatprep.subr.bf16.mxu0 0
        %1000 = vmatpush1.bf16.msra.mxu0 0
        %1001 = vmatprep.subr.bf16.mxu0 0
        %1002 = vmatpush1.bf16.msra.mxu0 %v985
        %1003 = vmatprep.subr.bf16.mxu0 0
        %1004 = vmatpush2.bf16.msra.mxu0 0
        %1005 = vmatprep.subr.bf16.mxu0 0
        %1006 = vmatpush2.bf16.msra.mxu0 0
        %1007 = vmatprep.subr.bf16.mxu0 0
        %1008 = vmatpush2.bf16.msra.mxu0 0
        %1009 = vmatprep.subr.bf16.mxu0 0
        %1010 = vmatpush2.bf16.msra.mxu0 0
        %1011 = vmatprep.subr.bf16.mxu0 0
        %1012 = vmatpush2.bf16.msra.mxu0 0
        %1013 = vmatprep.subr.bf16.mxu0 0
        %1014 = vmatpush2.bf16.msra.mxu0 0
        %1015 = vmatprep.subr.bf16.mxu0 0
        %1016 = vmatpush2.bf16.msra.mxu0 0
        %1017 = vmatprep.subr.bf16.mxu0 0
        %1018 = vmatpush2.bf16.msra.mxu0 0
        %1019 = vmatprep.mubr.bf16.mxu0 0
        %1020 = vmatmul.mubr.bf16.gmra.mxu0 %v982
        %v1021 = vpop.f32.mrf.mxu0
        %v1022 = vadd.f32 0.0, %v1021
        %v1023 = vpop.f32.mrf.mxu0
        %v1024 = vpop.f32.mrf.mxu0
        %v1025 = vpop.f32.mrf.mxu0
        %1026 = vdwg.mxu0
        %s1027 = scalar_lea.vmem [#allocation4], 8
        %v1028 = vld [vmem:[%s1027] sm:$0xff]
        %1030 = vset.pattern.permute.xlu0 0
        %1031 = vperm.xlu0 %1030, %v916
        %v1032 = vpop.permute.xlu0 %1031
        %v1034 = vmul.f32 %v1032, %v1028
        %v1035 = vadd.f32 %v1034, %v1022
        %1036 = vst.msk [vmem:[%s1027] sm:$0xff] %vm592, %v1035
        %1037 = vst.msk [vmem:[%s908] sm:$0xff] %vm661, %v913
        %v1038 = vld [vmem:[%s417 + $0x2] sm:$0x1]
        %v1039 = vld [vmem:[%s417 + $0x6] sm:$0x1]
        %v1040 = vld [vmem:[%s417 + $0xa] sm:$0x1]
        %v1041 = vld [vmem:[%s417 + $0xe] sm:$0x1]
        %v1042 = vld [vmem:[%s417 + $0x12] sm:$0x1]
        %v1043 = vld [vmem:[%s417 + $0x16] sm:$0x1]
        %v1044 = vld [vmem:[%s417 + $0x1a] sm:$0x1]
        %v1045 = vld [vmem:[%s417 + $0x1e] sm:$0x1]
        %v1046 = vpack.c.bf16 %v1038, %v1038
        %v1047 = vpack.c.bf16 %v1039, %v1039
        %v1048 = vpack.c.bf16 %v1040, %v1040
        %v1049 = vpack.c.bf16 %v1041, %v1041
        %v1050 = vpack.c.bf16 %v1042, %v1042
        %v1051 = vpack.c.bf16 %v1043, %v1043
        %v1052 = vpack.c.bf16 %v1044, %v1044
        %v1053 = vpack.c.bf16 %v1045, %v1045
        %v1054 = vld [vmem:[%s424 + $0x2] sm:$0x1]
        %v1055 = vld [vmem:[%s424 + $0x6] sm:$0x1]
        %v1056 = vld [vmem:[%s424 + $0xa] sm:$0x1]
        %v1057 = vld [vmem:[%s424 + $0xe] sm:$0x1]
        %v1058 = vld [vmem:[%s424 + $0x12] sm:$0x1]
        %v1059 = vld [vmem:[%s424 + $0x16] sm:$0x1]
        %v1060 = vld [vmem:[%s424 + $0x1a] sm:$0x1]
        %v1061 = vld [vmem:[%s424 + $0x1e] sm:$0x1]
        %v1062 = vpack.c.bf16 %v1054, %v1054
        %v1063 = vpack.c.bf16 %v1055, %v1055
        %v1064 = vpack.c.bf16 %v1056, %v1056
        %v1065 = vpack.c.bf16 %v1057, %v1057
        %v1066 = vpack.c.bf16 %v1058, %v1058
        %v1067 = vpack.c.bf16 %v1059, %v1059
        %v1068 = vpack.c.bf16 %v1060, %v1060
        %v1069 = vpack.c.bf16 %v1061, %v1061
        %v1078 = vunpack.c.l.b16 %v1046
        %v1079 = vunpack.c.l.b16 %v1047
        %v1080 = vunpack.c.l.b16 %v1048
        %v1081 = vunpack.c.l.b16 %v1049
        %v1082 = vunpack.c.l.b16 %v1050
        %v1083 = vunpack.c.l.b16 %v1051
        %v1084 = vunpack.c.l.b16 %v1052
        %v1085 = vunpack.c.l.b16 %v1053
        %v1086 = vrot.slane %v1079, 7
        %v1087 = vsel %vm540, %v1086, %v1078
        %v1088 = vrot.slane %v1080, 6
        %v1089 = vsel %vm543, %v1088, %v1087
        %v1090 = vrot.slane %v1081, 5
        %v1091 = vsel %vm546, %v1090, %v1089
        %v1092 = vrot.slane %v1082, 4
        %v1093 = vsel %vm549, %v1092, %v1091
        %v1094 = vrot.slane %v1083, 3
        %v1095 = vsel %vm552, %v1094, %v1093
        %v1096 = vrot.slane %v1084, 2
        %v1097 = vsel %vm555, %v1096, %v1095
        %v1098 = vrot.slane %v1085, 1
        %v1099 = vsel %vm558, %v1098, %v1097
        %v1100 = vpack.c.b16 %v1099, %v1099
        %v1109 = vunpack.c.l.b16 %v1062
        %v1110 = vunpack.c.l.b16 %v1063
        %v1111 = vunpack.c.l.b16 %v1064
        %v1112 = vunpack.c.l.b16 %v1065
        %v1113 = vunpack.c.l.b16 %v1066
        %v1114 = vunpack.c.l.b16 %v1067
        %v1115 = vunpack.c.l.b16 %v1068
        %v1116 = vunpack.c.l.b16 %v1069
        %v1117 = vrot.slane %v1110, 7
        %v1118 = vsel %vm540, %v1117, %v1109
        %v1119 = vrot.slane %v1111, 6
        %v1120 = vsel %vm543, %v1119, %v1118
        %v1121 = vrot.slane %v1112, 5
        %v1122 = vsel %vm546, %v1121, %v1120
        %v1123 = vrot.slane %v1113, 4
        %v1124 = vsel %vm549, %v1123, %v1122
        %v1125 = vrot.slane %v1114, 3
        %v1126 = vsel %vm552, %v1125, %v1124
        %v1127 = vrot.slane %v1115, 2
        %v1128 = vsel %vm555, %v1127, %v1126
        %v1129 = vrot.slane %v1116, 1
        %v1130 = vsel %vm558, %v1129, %v1128
        %v1131 = vpack.c.b16 %v1130, %v1130
        %v1133 = vsel %vm592, %v1100, 0
        %v1136 = vsel %vm592, %v1131, 0
        %1138 = vmatprep.subr.bf16.mxu0 0
        %1139 = vmatpush1.bf16.xpose.msra.mxu0 0
        %1140 = vmatprep.subr.bf16.mxu0 0
        %1141 = vmatpush1.bf16.xpose.msra.mxu0 0
        %1142 = vmatprep.subr.bf16.mxu0 0
        %1143 = vmatpush1.bf16.xpose.msra.mxu0 0
        %1144 = vmatprep.subr.bf16.mxu0 0
        %1145 = vmatpush1.bf16.xpose.msra.mxu0 0
        %1146 = vmatprep.subr.bf16.mxu0 0
        %1147 = vmatpush1.bf16.xpose.msra.mxu0 0
        %1148 = vmatprep.subr.bf16.mxu0 0
        %1149 = vmatpush1.bf16.xpose.msra.mxu0 0
        %1150 = vmatprep.subr.bf16.mxu0 0
        %1151 = vmatpush1.bf16.xpose.msra.mxu0 0
        %1152 = vmatprep.subr.bf16.mxu0 0
        %1153 = vmatpush1.bf16.xpose.msra.mxu0 %v1136
        %1154 = vmatprep.subr.bf16.mxu0 0
        %1155 = vmatpush2.bf16.xpose.msra.mxu0 0
        %1156 = vmatprep.subr.bf16.mxu0 0
        %1157 = vmatpush2.bf16.xpose.msra.mxu0 0
        %1158 = vmatprep.subr.bf16.mxu0 0
        %1159 = vmatpush2.bf16.xpose.msra.mxu0 0
        %1160 = vmatprep.subr.bf16.mxu0 0
        %1161 = vmatpush2.bf16.xpose.msra.mxu0 0
        %1162 = vmatprep.subr.bf16.mxu0 0
        %1163 = vmatpush2.bf16.xpose.msra.mxu0 0
        %1164 = vmatprep.subr.bf16.mxu0 0
        %1165 = vmatpush2.bf16.xpose.msra.mxu0 0
        %1166 = vmatprep.subr.bf16.mxu0 0
        %1167 = vmatpush2.bf16.xpose.msra.mxu0 0
        %1168 = vmatprep.subr.bf16.mxu0 0
        %1169 = vmatpush2.bf16.xpose.msra.mxu0 0
        %1170 = vmatprep.mubr.bf16.mxu0 0
        %1171 = vmatmul.mubr.bf16.gmra.mxu0 %v1133
        %v1172 = vpop.f32.mrf.mxu0
        %v1173 = vadd.f32 0.0, %v1172
        %v1174 = vpop.f32.mrf.mxu0
        %v1175 = vpop.f32.mrf.mxu0
        %v1176 = vpop.f32.mrf.mxu0
        %1177 = vdwg.mxu0
        %s1178 = scalar_lea.vmem [#allocation2], 16
        %v1179 = vld [vmem:[%s1178] sm:$0xff]
        %v1180 = vsel %vm592, %v1173, -inf
        %1181 = vmax.xlane.f32.xlu0 %v1180
        %v1182 = vpop.xlane.xlu0 %1181
        %v1183 = vmax.f32 %v1179, %v1182
        %v1184 = vsub.f32 %v1179, %v1183
        %v1185 = vmul.f32 %v1184, 1.442695
        %v1186 = vpow.pop %v1185
        %1188 = vset.pattern.permute.xlu0 0
        %1189 = vperm.xlu0 %1188, %v1183
        %v1190 = vpop.permute.xlu0 %1189
        %v1192 = vsub.f32 %v1173, %v1190
        %v1193 = vmul.f32 %v1192, 1.442695
        %v1194 = vpow.pop %v1193
        %s1195 = scalar_lea.vmem [#allocation3], 16
        %v1196 = vld [vmem:[%s1195] sm:$0xff]
        %v1197 = vmul.f32 %v1186, %v1196
        %v1198 = vsel %vm592, %v1194, 0.0
        %1199 = vadd.xlane.f32.xlu0 %v1198
        %v1200 = vpop.xlane.xlu0 %1199
        %v1201 = vadd.f32 %v1197, %v1200
        %1202 = vst.msk [vmem:[%s1195] sm:$0xff] %vm661, %v1201
        %v1203 = vpack.c.bf16 %v1194, %v1194
        %v1204 = vld [vmem:[%s431 + $0x2] sm:$0x1]
        %v1205 = vld [vmem:[%s431 + $0x6] sm:$0x1]
        %v1206 = vld [vmem:[%s431 + $0xa] sm:$0x1]
        %v1207 = vld [vmem:[%s431 + $0xe] sm:$0x1]
        %v1208 = vld [vmem:[%s431 + $0x12] sm:$0x1]
        %v1209 = vld [vmem:[%s431 + $0x16] sm:$0x1]
        %v1210 = vld [vmem:[%s431 + $0x1a] sm:$0x1]
        %v1211 = vld [vmem:[%s431 + $0x1e] sm:$0x1]
        %v1212 = vpack.c.bf16 %v1204, %v1204
        %v1213 = vpack.c.bf16 %v1205, %v1205
        %v1214 = vpack.c.bf16 %v1206, %v1206
        %v1215 = vpack.c.bf16 %v1207, %v1207
        %v1216 = vpack.c.bf16 %v1208, %v1208
        %v1217 = vpack.c.bf16 %v1209, %v1209
        %v1218 = vpack.c.bf16 %v1210, %v1210
        %v1219 = vpack.c.bf16 %v1211, %v1211
        %v1228 = vunpack.c.l.b16 %v1212
        %v1229 = vunpack.c.l.b16 %v1213
        %v1230 = vunpack.c.l.b16 %v1214
        %v1231 = vunpack.c.l.b16 %v1215
        %v1232 = vunpack.c.l.b16 %v1216
        %v1233 = vunpack.c.l.b16 %v1217
        %v1234 = vunpack.c.l.b16 %v1218
        %v1235 = vunpack.c.l.b16 %v1219
        %v1236 = vrot.slane %v1229, 7
        %v1237 = vsel %vm540, %v1236, %v1228
        %v1238 = vrot.slane %v1230, 6
        %v1239 = vsel %vm543, %v1238, %v1237
        %v1240 = vrot.slane %v1231, 5
        %v1241 = vsel %vm546, %v1240, %v1239
        %v1242 = vrot.slane %v1232, 4
        %v1243 = vsel %vm549, %v1242, %v1241
        %v1244 = vrot.slane %v1233, 3
        %v1245 = vsel %vm552, %v1244, %v1243
        %v1246 = vrot.slane %v1234, 2
        %v1247 = vsel %vm555, %v1246, %v1245
        %v1248 = vrot.slane %v1235, 1
        %v1249 = vsel %vm558, %v1248, %v1247
        %v1250 = vpack.c.b16 %v1249, %v1249
        %v1252 = vsel %vm592, %v1203, 0
        %v1255 = vsel %vm714, %v1250, 0
        %1257 = vmatprep.subr.bf16.mxu0 0
        %1258 = vmatpush1.bf16.msra.mxu0 0
        %1259 = vmatprep.subr.bf16.mxu0 0
        %1260 = vmatpush1.bf16.msra.mxu0 0
        %1261 = vmatprep.subr.bf16.mxu0 0
        %1262 = vmatpush1.bf16.msra.mxu0 0
        %1263 = vmatprep.subr.bf16.mxu0 0
        %1264 = vmatpush1.bf16.msra.mxu0 0
        %1265 = vmatprep.subr.bf16.mxu0 0
        %1266 = vmatpush1.bf16.msra.mxu0 0
        %1267 = vmatprep.subr.bf16.mxu0 0
        %1268 = vmatpush1.bf16.msra.mxu0 0
        %1269 = vmatprep.subr.bf16.mxu0 0
        %1270 = vmatpush1.bf16.msra.mxu0 0
        %1271 = vmatprep.subr.bf16.mxu0 0
        %1272 = vmatpush1.bf16.msra.mxu0 %v1255
        %1273 = vmatprep.subr.bf16.mxu0 0
        %1274 = vmatpush2.bf16.msra.mxu0 0
        %1275 = vmatprep.subr.bf16.mxu0 0
        %1276 = vmatpush2.bf16.msra.mxu0 0
        %1277 = vmatprep.subr.bf16.mxu0 0
        %1278 = vmatpush2.bf16.msra.mxu0 0
        %1279 = vmatprep.subr.bf16.mxu0 0
        %1280 = vmatpush2.bf16.msra.mxu0 0
        %1281 = vmatprep.subr.bf16.mxu0 0
        %1282 = vmatpush2.bf16.msra.mxu0 0
        %1283 = vmatprep.subr.bf16.mxu0 0
        %1284 = vmatpush2.bf16.msra.mxu0 0
        %1285 = vmatprep.subr.bf16.mxu0 0
        %1286 = vmatpush2.bf16.msra.mxu0 0
        %1287 = vmatprep.subr.bf16.mxu0 0
        %1288 = vmatpush2.bf16.msra.mxu0 0
        %1289 = vmatprep.mubr.bf16.mxu0 0
        %1290 = vmatmul.mubr.bf16.gmra.mxu0 %v1252
        %v1291 = vpop.f32.mrf.mxu0
        %v1292 = vadd.f32 0.0, %v1291
        %v1293 = vpop.f32.mrf.mxu0
        %v1294 = vpop.f32.mrf.mxu0
        %v1295 = vpop.f32.mrf.mxu0
        %1296 = vdwg.mxu0
        %s1297 = scalar_lea.vmem [#allocation4], 16
        %v1298 = vld [vmem:[%s1297] sm:$0xff]
        %1300 = vset.pattern.permute.xlu0 0
        %1301 = vperm.xlu0 %1300, %v1186
        %v1302 = vpop.permute.xlu0 %1301
        %v1304 = vmul.f32 %v1302, %v1298
        %v1305 = vadd.f32 %v1304, %v1292
        %1306 = vst.msk [vmem:[%s1297] sm:$0xff] %vm592, %v1305
        %1307 = vst.msk [vmem:[%s1178] sm:$0xff] %vm661, %v1183
        %v1308 = vld [vmem:[%s417 + $0x3] sm:$0x1]
        %v1309 = vld [vmem:[%s417 + $0x7] sm:$0x1]
        %v1310 = vld [vmem:[%s417 + $0xb] sm:$0x1]
        %v1311 = vld [vmem:[%s417 + $0xf] sm:$0x1]
        %v1312 = vld [vmem:[%s417 + $0x13] sm:$0x1]
        %v1313 = vld [vmem:[%s417 + $0x17] sm:$0x1]
        %v1314 = vld [vmem:[%s417 + $0x1b] sm:$0x1]
        %v1315 = vld [vmem:[%s417 + $0x1f] sm:$0x1]
        %v1316 = vpack.c.bf16 %v1308, %v1308
        %v1317 = vpack.c.bf16 %v1309, %v1309
        %v1318 = vpack.c.bf16 %v1310, %v1310
        %v1319 = vpack.c.bf16 %v1311, %v1311
        %v1320 = vpack.c.bf16 %v1312, %v1312
        %v1321 = vpack.c.bf16 %v1313, %v1313
        %v1322 = vpack.c.bf16 %v1314, %v1314
        %v1323 = vpack.c.bf16 %v1315, %v1315
        %v1324 = vld [vmem:[%s424 + $0x3] sm:$0x1]
        %v1325 = vld [vmem:[%s424 + $0x7] sm:$0x1]
        %v1326 = vld [vmem:[%s424 + $0xb] sm:$0x1]
        %v1327 = vld [vmem:[%s424 + $0xf] sm:$0x1]
        %v1328 = vld [vmem:[%s424 + $0x13] sm:$0x1]
        %v1329 = vld [vmem:[%s424 + $0x17] sm:$0x1]
        %v1330 = vld [vmem:[%s424 + $0x1b] sm:$0x1]
        %v1331 = vld [vmem:[%s424 + $0x1f] sm:$0x1]
        %v1332 = vpack.c.bf16 %v1324, %v1324
        %v1333 = vpack.c.bf16 %v1325, %v1325
        %v1334 = vpack.c.bf16 %v1326, %v1326
        %v1335 = vpack.c.bf16 %v1327, %v1327
        %v1336 = vpack.c.bf16 %v1328, %v1328
        %v1337 = vpack.c.bf16 %v1329, %v1329
        %v1338 = vpack.c.bf16 %v1330, %v1330
        %v1339 = vpack.c.bf16 %v1331, %v1331
        %v1348 = vunpack.c.l.b16 %v1316
        %v1349 = vunpack.c.l.b16 %v1317
        %v1350 = vunpack.c.l.b16 %v1318
        %v1351 = vunpack.c.l.b16 %v1319
        %v1352 = vunpack.c.l.b16 %v1320
        %v1353 = vunpack.c.l.b16 %v1321
        %v1354 = vunpack.c.l.b16 %v1322
        %v1355 = vunpack.c.l.b16 %v1323
        %v1356 = vrot.slane %v1349, 7
        %v1357 = vsel %vm540, %v1356, %v1348
        %v1358 = vrot.slane %v1350, 6
        %v1359 = vsel %vm543, %v1358, %v1357
        %v1360 = vrot.slane %v1351, 5
        %v1361 = vsel %vm546, %v1360, %v1359
        %v1362 = vrot.slane %v1352, 4
        %v1363 = vsel %vm549, %v1362, %v1361
        %v1364 = vrot.slane %v1353, 3
        %v1365 = vsel %vm552, %v1364, %v1363
        %v1366 = vrot.slane %v1354, 2
        %v1367 = vsel %vm555, %v1366, %v1365
        %v1368 = vrot.slane %v1355, 1
        %v1369 = vsel %vm558, %v1368, %v1367
        %v1370 = vpack.c.b16 %v1369, %v1369
        %v1379 = vunpack.c.l.b16 %v1332
        %v1380 = vunpack.c.l.b16 %v1333
        %v1381 = vunpack.c.l.b16 %v1334
        %v1382 = vunpack.c.l.b16 %v1335
        %v1383 = vunpack.c.l.b16 %v1336
        %v1384 = vunpack.c.l.b16 %v1337
        %v1385 = vunpack.c.l.b16 %v1338
        %v1386 = vunpack.c.l.b16 %v1339
        %v1387 = vrot.slane %v1380, 7
        %v1388 = vsel %vm540, %v1387, %v1379
        %v1389 = vrot.slane %v1381, 6
        %v1390 = vsel %vm543, %v1389, %v1388
        %v1391 = vrot.slane %v1382, 5
        %v1392 = vsel %vm546, %v1391, %v1390
        %v1393 = vrot.slane %v1383, 4
        %v1394 = vsel %vm549, %v1393, %v1392
        %v1395 = vrot.slane %v1384, 3
        %v1396 = vsel %vm552, %v1395, %v1394
        %v1397 = vrot.slane %v1385, 2
        %v1398 = vsel %vm555, %v1397, %v1396
        %v1399 = vrot.slane %v1386, 1
        %v1400 = vsel %vm558, %v1399, %v1398
        %v1401 = vpack.c.b16 %v1400, %v1400
        %v1403 = vsel %vm592, %v1370, 0
        %v1406 = vsel %vm592, %v1401, 0
        %1408 = vmatprep.subr.bf16.mxu0 0
        %1409 = vmatpush1.bf16.xpose.msra.mxu0 0
        %1410 = vmatprep.subr.bf16.mxu0 0
        %1411 = vmatpush1.bf16.xpose.msra.mxu0 0
        %1412 = vmatprep.subr.bf16.mxu0 0
        %1413 = vmatpush1.bf16.xpose.msra.mxu0 0
        %1414 = vmatprep.subr.bf16.mxu0 0
        %1415 = vmatpush1.bf16.xpose.msra.mxu0 0
        %1416 = vmatprep.subr.bf16.mxu0 0
        %1417 = vmatpush1.bf16.xpose.msra.mxu0 0
        %1418 = vmatprep.subr.bf16.mxu0 0
        %1419 = vmatpush1.bf16.xpose.msra.mxu0 0
        %1420 = vmatprep.subr.bf16.mxu0 0
        %1421 = vmatpush1.bf16.xpose.msra.mxu0 0
        %1422 = vmatprep.subr.bf16.mxu0 0
        %1423 = vmatpush1.bf16.xpose.msra.mxu0 %v1406
        %1424 = vmatprep.subr.bf16.mxu0 0
        %1425 = vmatpush2.bf16.xpose.msra.mxu0 0
        %1426 = vmatprep.subr.bf16.mxu0 0
        %1427 = vmatpush2.bf16.xpose.msra.mxu0 0
        %1428 = vmatprep.subr.bf16.mxu0 0
        %1429 = vmatpush2.bf16.xpose.msra.mxu0 0
        %1430 = vmatprep.subr.bf16.mxu0 0
        %1431 = vmatpush2.bf16.xpose.msra.mxu0 0
        %1432 = vmatprep.subr.bf16.mxu0 0
        %1433 = vmatpush2.bf16.xpose.msra.mxu0 0
        %1434 = vmatprep.subr.bf16.mxu0 0
        %1435 = vmatpush2.bf16.xpose.msra.mxu0 0
        %1436 = vmatprep.subr.bf16.mxu0 0
        %1437 = vmatpush2.bf16.xpose.msra.mxu0 0
        %1438 = vmatprep.subr.bf16.mxu0 0
        %1439 = vmatpush2.bf16.xpose.msra.mxu0 0
        %1440 = vmatprep.mubr.bf16.mxu0 0
        %1441 = vmatmul.mubr.bf16.gmra.mxu0 %v1403
        %v1442 = vpop.f32.mrf.mxu0
        %v1443 = vadd.f32 0.0, %v1442
        %v1444 = vpop.f32.mrf.mxu0
        %v1445 = vpop.f32.mrf.mxu0
        %v1446 = vpop.f32.mrf.mxu0
        %1447 = vdwg.mxu0
        %s1448 = scalar_lea.vmem [#allocation2], 24
        %v1449 = vld [vmem:[%s1448] sm:$0xff]
        %v1450 = vsel %vm592, %v1443, -inf
        %1451 = vmax.xlane.f32.xlu0 %v1450
        %v1452 = vpop.xlane.xlu0 %1451
        %v1453 = vmax.f32 %v1449, %v1452
        %v1454 = vsub.f32 %v1449, %v1453
        %v1455 = vmul.f32 %v1454, 1.442695
        %v1456 = vpow.pop %v1455
        %1458 = vset.pattern.permute.xlu0 0
        %1459 = vperm.xlu0 %1458, %v1453
        %v1460 = vpop.permute.xlu0 %1459
        %v1462 = vsub.f32 %v1443, %v1460
        %v1463 = vmul.f32 %v1462, 1.442695
        %v1464 = vpow.pop %v1463
        %s1465 = scalar_lea.vmem [#allocation3], 24
        %v1466 = vld [vmem:[%s1465] sm:$0xff]
        %v1467 = vmul.f32 %v1456, %v1466
        %v1468 = vsel %vm592, %v1464, 0.0
        %1469 = vadd.xlane.f32.xlu0 %v1468
        %v1470 = vpop.xlane.xlu0 %1469
        %v1471 = vadd.f32 %v1467, %v1470
        %1472 = vst.msk [vmem:[%s1465] sm:$0xff] %vm661, %v1471
        %v1473 = vpack.c.bf16 %v1464, %v1464
        %v1474 = vld [vmem:[%s431 + $0x3] sm:$0x1]
        %v1475 = vld [vmem:[%s431 + $0x7] sm:$0x1]
        %v1476 = vld [vmem:[%s431 + $0xb] sm:$0x1]
        %v1477 = vld [vmem:[%s431 + $0xf] sm:$0x1]
        %v1478 = vld [vmem:[%s431 + $0x13] sm:$0x1]
        %v1479 = vld [vmem:[%s431 + $0x17] sm:$0x1]
        %v1480 = vld [vmem:[%s431 + $0x1b] sm:$0x1]
        %v1481 = vld [vmem:[%s431 + $0x1f] sm:$0x1]
        %v1482 = vpack.c.bf16 %v1474, %v1474
        %v1483 = vpack.c.bf16 %v1475, %v1475
        %v1484 = vpack.c.bf16 %v1476, %v1476
        %v1485 = vpack.c.bf16 %v1477, %v1477
        %v1486 = vpack.c.bf16 %v1478, %v1478
        %v1487 = vpack.c.bf16 %v1479, %v1479
        %v1488 = vpack.c.bf16 %v1480, %v1480
        %v1489 = vpack.c.bf16 %v1481, %v1481
        %v1498 = vunpack.c.l.b16 %v1482
        %v1499 = vunpack.c.l.b16 %v1483
        %v1500 = vunpack.c.l.b16 %v1484
        %v1501 = vunpack.c.l.b16 %v1485
        %v1502 = vunpack.c.l.b16 %v1486
        %v1503 = vunpack.c.l.b16 %v1487
        %v1504 = vunpack.c.l.b16 %v1488
        %v1505 = vunpack.c.l.b16 %v1489
        %v1506 = vrot.slane %v1499, 7
        %v1507 = vsel %vm540, %v1506, %v1498
        %v1508 = vrot.slane %v1500, 6
        %v1509 = vsel %vm543, %v1508, %v1507
        %v1510 = vrot.slane %v1501, 5
        %v1511 = vsel %vm546, %v1510, %v1509
        %v1512 = vrot.slane %v1502, 4
        %v1513 = vsel %vm549, %v1512, %v1511
        %v1514 = vrot.slane %v1503, 3
        %v1515 = vsel %vm552, %v1514, %v1513
        %v1516 = vrot.slane %v1504, 2
        %v1517 = vsel %vm555, %v1516, %v1515
        %v1518 = vrot.slane %v1505, 1
        %v1519 = vsel %vm558, %v1518, %v1517
        %v1520 = vpack.c.b16 %v1519, %v1519
        %v1522 = vsel %vm592, %v1473, 0
        %v1525 = vsel %vm714, %v1520, 0
        %1527 = vmatprep.subr.bf16.mxu0 0
        %1528 = vmatpush1.bf16.msra.mxu0 0
        %1529 = vmatprep.subr.bf16.mxu0 0
        %1530 = vmatpush1.bf16.msra.mxu0 0
        %1531 = vmatprep.subr.bf16.mxu0 0
        %1532 = vmatpush1.bf16.msra.mxu0 0
        %1533 = vmatprep.subr.bf16.mxu0 0
        %1534 = vmatpush1.bf16.msra.mxu0 0
        %1535 = vmatprep.subr.bf16.mxu0 0
        %1536 = vmatpush1.bf16.msra.mxu0 0
        %1537 = vmatprep.subr.bf16.mxu0 0
        %1538 = vmatpush1.bf16.msra.mxu0 0
        %1539 = vmatprep.subr.bf16.mxu0 0
        %1540 = vmatpush1.bf16.msra.mxu0 0
        %1541 = vmatprep.subr.bf16.mxu0 0
        %1542 = vmatpush1.bf16.msra.mxu0 %v1525
        %1543 = vmatprep.subr.bf16.mxu0 0
        %1544 = vmatpush2.bf16.msra.mxu0 0
        %1545 = vmatprep.subr.bf16.mxu0 0
        %1546 = vmatpush2.bf16.msra.mxu0 0
        %1547 = vmatprep.subr.bf16.mxu0 0
        %1548 = vmatpush2.bf16.msra.mxu0 0
        %1549 = vmatprep.subr.bf16.mxu0 0
        %1550 = vmatpush2.bf16.msra.mxu0 0
        %1551 = vmatprep.subr.bf16.mxu0 0
        %1552 = vmatpush2.bf16.msra.mxu0 0
        %1553 = vmatprep.subr.bf16.mxu0 0
        %1554 = vmatpush2.bf16.msra.mxu0 0
        %1555 = vmatprep.subr.bf16.mxu0 0
        %1556 = vmatpush2.bf16.msra.mxu0 0
        %1557 = vmatprep.subr.bf16.mxu0 0
        %1558 = vmatpush2.bf16.msra.mxu0 0
        %1559 = vmatprep.mubr.bf16.mxu0 0
        %1560 = vmatmul.mubr.bf16.gmra.mxu0 %v1522
        %v1561 = vpop.f32.mrf.mxu0
        %v1562 = vadd.f32 0.0, %v1561
        %v1563 = vpop.f32.mrf.mxu0
        %v1564 = vpop.f32.mrf.mxu0
        %v1565 = vpop.f32.mrf.mxu0
        %1566 = vdwg.mxu0
        %s1567 = scalar_lea.vmem [#allocation4], 24
        %v1568 = vld [vmem:[%s1567] sm:$0xff]
        %1570 = vset.pattern.permute.xlu0 0
        %1571 = vperm.xlu0 %1570, %v1456
        %v1572 = vpop.permute.xlu0 %1571
        %v1574 = vmul.f32 %v1572, %v1568
        %v1575 = vadd.f32 %v1574, %v1562
        %1576 = vst.msk [vmem:[%s1567] sm:$0xff] %vm592, %v1575
        %1577 = vst.msk [vmem:[%s1448] sm:$0xff] %vm661, %v1453
        // Predicated region
        $region160: #{multi_head_attention.4} parent=142 // pred_check
          %p1578 = pneg %p473
        $region161: #{multi_head_attention.4} parent=142 // pred_check_branch
          %1580 = sbr.rel (%p1578) target = $region163
        $region162: #{multi_head_attention.4} parent=142 // pred_region
          %v1581 = vld [vmem:[#allocation3] sm:$0xff]
          %v1582 = vrcp.pop %v1581
          %v1583 = vmul.f32 %v1582, 0.17677669
          %v1584 = vld [vmem:[#allocation4] sm:$0xff]
          %1586 = vset.pattern.permute.xlu0 0
          %1587 = vperm.xlu0 %1586, %v1583
          %v1588 = vpop.permute.xlu0 %1587
          %v1590 = vmul.f32 %v1584, %v1588
          %v1591 = vld [vmem:[%s925] sm:$0xff]
          %v1592 = vrcp.pop %v1591
          %v1593 = vmul.f32 %v1592, 0.17677669
          %v1594 = vld [vmem:[%s1027] sm:$0xff]
          %1596 = vset.pattern.permute.xlu0 0
          %1597 = vperm.xlu0 %1596, %v1593
          %v1598 = vpop.permute.xlu0 %1597
          %v1600 = vmul.f32 %v1594, %v1598
          %v1601 = vld [vmem:[%s1195] sm:$0xff]
          %v1602 = vrcp.pop %v1601
          %v1603 = vmul.f32 %v1602, 0.17677669
          %v1604 = vld [vmem:[%s1297] sm:$0xff]
          %1606 = vset.pattern.permute.xlu0 0
          %1607 = vperm.xlu0 %1606, %v1603
          %v1608 = vpop.permute.xlu0 %1607
          %v1610 = vmul.f32 %v1604, %v1608
          %v1611 = vld [vmem:[%s1465] sm:$0xff]
          %v1612 = vrcp.pop %v1611
          %v1613 = vmul.f32 %v1612, 0.17677669
          %v1614 = vld [vmem:[%s1567] sm:$0xff]
          %1616 = vset.pattern.permute.xlu0 0
          %1617 = vperm.xlu0 %1616, %v1613
          %v1618 = vpop.permute.xlu0 %1617
          %v1620 = vmul.f32 %v1614, %v1618
          %1622 = vrot.lane.b32.xlu0 %v1600, 8
          %v1623 = vpop.permute.xlu0 %1622
          %1626 = vrot.lane.b32.xlu0 %v1610, 16
          %v1627 = vpop.permute.xlu0 %1626
          %1630 = vrot.lane.b32.xlu0 %v1620, 24
          %v1631 = vpop.permute.xlu0 %1630
          %v1633 = vsel %vm592, %v1590, %v1623
          %vm1634 = vcmask 130048
          %v1635 = vsel %vm1634, %v1633, %v1627
          %vm1636 = vcmask 195584
          %v1637 = vsel %vm1636, %v1635, %v1631
          %vm1638 = vcmask 261120
          %1639 = vst.msk [vmem:[%s471] sm:$0xff] %vm1638, %v1637
        $region163: #{multi_head_attention.4} parent=142 // pred_fallthru
          _
        %p1640 = scmp.lt.s32.totalorder %s19, 1
        %s1641 = scalar_select %p1640, %s19, 1
        %p1642 = scmp.lt.s32.totalorder %s20, 0
        %s1643 = scalar_select %p1642, %s20, 0
        %s1644 = sadd.s32 %s1643, %s1641
        %s1645 = smul.addr %s1644, 8
        %s1646 = scalar_lea.vmem %s3, %s1645
        // Predicated region
        $region164: #{multi_head_attention.4} parent=142 // pred_check
          %p1647 = pneg %p137
        $region165: #{multi_head_attention.4} parent=142 // pred_check_branch
          %1649 = sbr.rel (%p1647) target = $region167
        $region166: #{multi_head_attention.4} parent=142 // pred_region
          _
        $region167: #{multi_head_attention.4} parent=142 // pred_fallthru
          _
      $region143: #{multi_head_attention.4} parent=5 // pred_fallthru
        _
      %p1650 = scmp.le.s32.totalorder 2, %s9
      // Predicated region
      $region168: #{multi_head_attention.4} parent=5 // pred_check
        %p1651 = pneg %p1650
      $region169: #{multi_head_attention.4} parent=5 // pred_check_branch
        %1653 = sbr.rel (%p1651) target = $region171
      $region170: #{multi_head_attention.4} parent=5 // pred_region
        %s1654 = ssub.s32 %s9, 2
        // Predicated region
        $region172: #{multi_head_attention.4} parent=170 // pred_check
          %p1655 = pneg %p143
        $region173: #{multi_head_attention.4} parent=170 // pred_check_branch
          %1657 = sbr.rel (%p1655) target = $region175
        $region174: #{multi_head_attention.4} parent=170 // pred_region
          %p1658 = scmp.lt.s32.totalorder %s22, 1
          %s1659 = scalar_select %p1658, %s22, 1
          %p1660 = scmp.lt.s32.totalorder %s23, 0
          %s1661 = scalar_select %p1660, %s23, 0
          %s1662 = sadd.s32 %s1661, %s1659
          %s1663 = smul.addr %s1662, 8
          %s1664 = scalar_lea.vmem %s3, %s1663
        $region175: #{multi_head_attention.4} parent=170 // pred_fallthru
          _
      $region171: #{multi_head_attention.4} parent=5 // pred_fallthru
        _
    $region6: #{multi_head_attention.4} parent=1 // loop_footer
      %s13 = sadd.s32 1, %s9
    $region7: #{multi_head_attention.4} parent=1 // loop_footer_branch
      %8 = sbr.rel target = $region3
    $region8: #{multi_head_attention.4} parent=1 // loop_exit
      _

</llo_original>
